<compile_context>
chip_gen: v7x
topology: tpu7x:2x2x1
jax: 0.10.0
libtpu: 0.0.40
codegen_flags: <defaults>
</compile_context>

<pallas_src>
import functools

import jax
import jax.numpy as jnp
import numpy as np
from jax.experimental import pallas as pl
from jax.experimental.pallas import tpu as pltpu


# -----------------------------------------------------------------------------
# Fused Pallas kernel: one image per grid step, channels-first / pixels-on-lanes
# -----------------------------------------------------------------------------
def _decode_block_kernel(crop_ref, up_ref, w1c_ref, w1u_ref, b1_ref, w2_ref,
                         b2_ref, o_ref, *, h, w):
    """crop_ref : (1, Cc, Hp*Wp)  reflection-padded, bilinear-resized skip input
       up_ref   : (1, Ci, Hp*Wp)  reflection-padded, bilinear-upsampled input
       w1c_ref  : (Co, 9*Cc)      conv1 weights acting on the crop channels
       w1u_ref  : (Co, 9*Ci)      conv1 weights on the up channels (1x1 folded in)
       b1_ref   : (Co, 1)         conv1 bias (1x1 bias folded in)
       w2_ref   : (Co, 9*Co)      conv2 weights
       b2_ref   : (Co, 1)
       o_ref    : (1, Co, H*W)    lane-dense NCHW output block"""
    co = o_ref.shape[1]
    wp = w + 2
    # conv outputs are produced at "pitch wp": flat position p = y*wp + x.  m
    # covers every valid (y, x) and keeps all 9 tap slices inside the padded image
    # (the two junk columns per row are never read back and are dropped at the end).
    m = (h - 1) * wp + w
    offs = [dy * wp + dx for dy in range(3) for dx in range(3)]

    def tap_stack(x_flat):
        # (C, Hp*Wp) -> (9*C, m) im2col block.  Every tap is a contiguous lane
        # slice of the flattened padded image (a pure lane shift); the stack /
        # reshape only touch leading dims, so no relayout copies are generated.
        c = x_flat.shape[0]
        return jnp.stack([x_flat[:, k:k + m] for k in offs], axis=0).reshape(9 * c, m)

    def reflect_pad_rows(y_g):
        # (C, m) conv output at pitch wp (junk in cols >= w) -> ReflectionPad2d(1)
        # of its valid (h, w) grid, flattened to (C, Hp*Wp).  Built as a value in
        # registers with one lane-dim concat: no narrow masked scratch stores.
        pieces = []
        for y in [1] + list(range(h)) + [h - 2]:          # reflected row order
            r = y * wp
            pieces += [y_g[:, r + 1:r + 2],               # left  reflected column
                       y_g[:, r:r + w],                   # valid row
                       y_g[:, r + w - 2:r + w - 1]]       # right reflected column
        return jnp.concatenate(pieces, axis=1)

    crop_p = crop_ref[0]                                  # (Cc, Hp*Wp)
    up_p = up_ref[0]                                      # (Ci, Hp*Wp)

    # conv1 = (folded 1x1 up-conv) + channel concat + 3x3 conv + ReLU, as two MXU
    # pushes (K = 9*Cc and 9*Ci); crop/up stay separate so no concat is needed.
    acc1 = jnp.dot(w1c_ref[...], tap_stack(crop_p), preferred_element_type=jnp.float32)
    acc1 = acc1 + jnp.dot(w1u_ref[...], tap_stack(up_p),
                          preferred_element_type=jnp.float32)
    h1 = jnp.maximum(acc1 + b1_ref[...], 0.0)             # (Co, m)

    # conv2 = 3x3 conv + ReLU as one MXU push (K = 9*Co); h1 never touches HBM.
    h1p = reflect_pad_rows(h1)                            # (Co, Hp*Wp)
    acc2 = jnp.dot(w2_ref[...], tap_stack(h1p), preferred_element_type=jnp.float32)
    h2 = jnp.maximum(acc2 + b2_ref[...], 0.0)             # (Co, m)

    # drop the two junk columns per row -> lane-dense (Co, H*W) NCHW block.
    o_ref[0] = jnp.concatenate([h2[:, y * wp:y * wp + w] for y in range(h)], axis=1)


# -----------------------------------------------------------------------------
# XLA glue: bilinear resize (align_corners=False) with ReflectionPad2d(1) folded
# into the resize matrices -- kept in NCHW so there are no transposes.
# -----------------------------------------------------------------------------
def _bilinear_matrix(in_size, out_size):
    """PyTorch bilinear interpolation (align_corners=False) as a dense matrix."""
    scale = in_size / out_size
    i = np.arange(out_size, dtype=np.float64)
    src = np.maximum(scale * (i + 0.5) - 0.5, 0.0)
    idx0 = np.minimum(np.floor(src).astype(np.int64), in_size - 1)
    idx1 = np.minimum(idx0 + 1, in_size - 1)
    lam1 = src - idx0
    lam0 = 1.0 - lam1
    A = np.zeros((out_size, in_size), dtype=np.float32)
    A[np.arange(out_size), idx0] += lam0.astype(np.float32)
    A[np.arange(out_size), idx1] += lam1.astype(np.float32)
    return A


def _padded_resize_matrix(in_size, out_size):
    """Bilinear-resize matrix with a reflection pad of 1 folded in: (out+2, in)."""
    A = _bilinear_matrix(in_size, out_size)
    P = np.zeros((out_size + 2, out_size), dtype=np.float32)
    P[1:out_size + 1] = np.eye(out_size, dtype=np.float32)
    P[0, 1] = 1.0
    P[out_size + 1, out_size - 2] = 1.0
    return jnp.asarray(P @ A)


def _resize_pad_flat_nchw(x, out_h, out_w):
    """(N, C, Hin, Win) -> (N, C, (out_h+2)*(out_w+2)): bilinear resize and
    ReflectionPad2d(1) in one pair of einsums; final reshape is contiguous."""
    Ah = _padded_resize_matrix(x.shape[2], out_h)         # (Hp, Hin)
    Aw = _padded_resize_matrix(x.shape[3], out_w)         # (Wp, Win)
    y = jnp.einsum("yh,nchw->ncyw", Ah, x)
    y = jnp.einsum("xw,ncyw->ncyx", Aw, y)                # (N, C, Hp, Wp)
    return y.reshape(x.shape[0], x.shape[1], (out_h + 2) * (out_w + 2))


# -----------------------------------------------------------------------------
# decode_block forward (Pallas path) + params
# -----------------------------------------------------------------------------
def init_decode_block_params(key, in_channels, out_channels):
    ks = jax.random.split(key, 6)
    s = 0.1
    return {
        # nn.Conv2d weights are OIHW, as in PyTorch.
        "w_up": s * jax.random.normal(ks[0], (out_channels, in_channels, 1, 1), jnp.float32),
        "b_up": s * jax.random.normal(ks[1], (out_channels,), jnp.float32),
        "w1": s * jax.random.normal(ks[2], (out_channels, in_channels, 3, 3), jnp.float32),
        "b1": s * jax.random.normal(ks[3], (out_channels,), jnp.float32),
        "w2": s * jax.random.normal(ks[4], (out_channels, out_channels, 3, 3), jnp.float32),
        "b2": s * jax.random.normal(ks[5], (out_channels,), jnp.float32),
    }


def decode_block_forward(crop_input, upsampling_input, params):
    """Pallas implementation.  Inputs/outputs are NCHW like the nn.Module."""
    n, ci, hu, wu = upsampling_input.shape
    cc = crop_input.shape[1]
    co = params["b_up"].shape[0]
    ho, wo = 2 * hu, 2 * wu
    hpwp = (ho + 2) * (wo + 2)

    # --- glue: only the bilinear resizes remain (pad folded in, NCHW, no
    # transposes / concat / stack / separate pad passes through HBM).
    crop_pf = _resize_pad_flat_nchw(crop_input, ho, wo)       # (N, Cc, Hp*Wp)
    up_pf = _resize_pad_flat_nchw(upsampling_input, ho, wo)   # (N, Ci, Hp*Wp)

    # --- fold Conv1x1 (w_up, b_up) exactly into conv1 (linear & pointwise, so it
    # commutes with the reflection pad) and lay weights out for the im2col
    # matmuls: row order = (tap k, channel).
    w_up = jnp.transpose(params["w_up"][:, :, 0, 0], (1, 0))          # (Ci, Co)
    w1 = jnp.transpose(params["w1"], (2, 3, 1, 0))                    # OIHW -> HWIO
    w1_crop = w1[:, :, :cc, :]                                        # (3,3,Cc,Co)
    w1_upc = w1[:, :, cc:, :]                                         # (3,3,Co,Co)
    w1_up_eff = jnp.einsum("cd,hwde->hwce", w_up, w1_upc)             # (3,3,Ci,Co)
    b1_eff = params["b1"] + jnp.einsum("d,hwde->e", params["b_up"], w1_upc)
    w1c_t = w1_crop.reshape(9 * cc, co).T                             # (Co, 9*Cc)
    w1u_t = w1_up_eff.reshape(9 * ci, co).T                           # (Co, 9*Ci)
    w2_t = jnp.transpose(params["w2"], (2, 3, 1, 0)).reshape(9 * co, co).T

    kernel = functools.partial(_decode_block_kernel, h=ho, w=wo)
    out = pl.pallas_call(
        kernel,
        out_shape=jax.ShapeDtypeStruct((n, co, ho * wo), jnp.float32),
        grid=(n,),
        in_specs=[
            pl.BlockSpec((1, cc, hpwp), lambda i: (i, 0, 0)),          # per-image slab
            pl.BlockSpec((1, ci, hpwp), lambda i: (i, 0, 0)),
            pl.BlockSpec((co, 9 * cc), lambda i: (0, 0)),              # resident weights
            pl.BlockSpec((co, 9 * ci), lambda i: (0, 0)),
            pl.BlockSpec((co, 1), lambda i: (0, 0)),
            pl.BlockSpec((co, 9 * co), lambda i: (0, 0)),
            pl.BlockSpec((co, 1), lambda i: (0, 0)),
        ],
        out_specs=pl.BlockSpec((1, co, ho * wo), lambda i: (i, 0, 0)),  # lane-dense NCHW
        compiler_params=pltpu.CompilerParams(
            dimension_semantics=("parallel",)),    # 2 image-steps feed both v7x TCs
    )(crop_pf, up_pf, w1c_t, w1u_t, b1_eff.reshape(co, 1), w2_t,
      params["b2"].reshape(co, 1))

    return out.reshape(n, co, ho, wo)              # contiguous (free) reshape to NCHW


# -----------------------------------------------------------------------------
# Pure-JAX reference (literal module order, no weight/pad folding) for verification
# -----------------------------------------------------------------------------
def _bilinear_resize_nchw(x, out_h, out_w):
    Ah = jnp.asarray(_bilinear_matrix(x.shape[2], out_h))
    Aw = jnp.asarray(_bilinear_matrix(x.shape[3], out_w))
    y = jnp.einsum("yh,nchw->ncyw", Ah, x)
    return jnp.einsum("xw,ncyw->ncyx", Aw, y)


def decode_block_reference(crop_input, upsampling_input, params):
    n, ci, hu, wu = upsampling_input.shape
    ho, wo = 2 * hu, 2 * wu
    crop_rs = _bilinear_resize_nchw(crop_input, ho, wo)
    up_rs = _bilinear_resize_nchw(upsampling_input, ho, wo)
    up_conv = (jnp.einsum("nchw,oc->nohw", up_rs, params["w_up"][:, :, 0, 0])
               + params["b_up"][None, :, None, None])
    x = jnp.concatenate([crop_rs, up_conv], axis=1)

    def conv3x3_relu(x, w_oihw, b):
        hh, ww = x.shape[2], x.shape[3]
        xp = jnp.pad(x, ((0, 0), (0, 0), (1, 1), (1, 1)), mode="reflect")
        acc = jnp.zeros((x.shape[0], w_oihw.shape[0], hh, ww), jnp.float32)
        for dy in range(3):
            for dx in range(3):
                acc = acc + jnp.einsum("nchw,oc->nohw",
                                       xp[:, :, dy:dy + hh, dx:dx + ww],
                                       w_oihw[:, :, dy, dx])
        return jnp.maximum(acc + b[None, :, None, None], 0.0)

    h1 = conv3x3_relu(x, params["w1"], params["b1"])
    return conv3x3_relu(h1, params["w2"], params["b2"])


if __name__ == "__main__":
    in_channels, out_channels = 8, 4
    N = 2

    key = jax.random.PRNGKey(0)
    kp, kc, ku = jax.random.split(key, 3)
    params = init_decode_block_params(kp, in_channels, out_channels)

    # crop carries the skip connection: in_channels - out_channels features
    crop_input = jax.random.normal(kc, (N, in_channels - out_channels, 12, 12), jnp.float32)
    upsampling_input = jax.random.normal(ku, (N, in_channels, 8, 8), jnp.float32)

    fwd = jax.jit(decode_block_forward)
    out = jax.block_until_ready(fwd(crop_input, upsampling_input, params))
    assert out.shape == (N, out_channels, 16, 16), out.shape

    ref = jax.block_until_ready(
        decode_block_reference(crop_input, upsampling_input, params))
    max_err = float(jnp.max(jnp.abs(out - ref)))
    assert jnp.allclose(out, ref, atol=1e-4, rtol=1e-4), max_err

    print("KERNEL_OK")
</pallas_src>

<mosaic_0001>
module attributes {stable_mosaic.version = 11 : i64} {
  func.func @_decode_block_kernel(%arg0: i32, %arg1: memref<1x4x324xf32, #tpu.memory_space<vmem>>, %arg2: memref<1x8x324xf32, #tpu.memory_space<vmem>>, %arg3: memref<4x36xf32, #tpu.memory_space<vmem>>, %arg4: memref<4x72xf32, #tpu.memory_space<vmem>>, %arg5: memref<4x1xf32, #tpu.memory_space<vmem>>, %arg6: memref<4x36xf32, #tpu.memory_space<vmem>>, %arg7: memref<4x1xf32, #tpu.memory_space<vmem>>, %arg8: memref<1x4x256xf32, #tpu.memory_space<vmem>>) attributes {dimension_semantics = [#tpu.dimension_semantics<parallel>], iteration_bounds = array<i64: 2>, scalar_prefetch = 0 : i64, scratch_operands = 0 : i64, tpu.core_type = #tpu.core_type<tc>, window_params = [{transform_indices = @transform_0, window_bounds = array<i64: 1, 4, 324>}, {transform_indices = @transform_1, window_bounds = array<i64: 1, 8, 324>}, {pipeline_mode = #tpu.pipeline_mode<synchronous>, transform_indices = @transform_2, window_bounds = array<i64: 4, 36>}, {pipeline_mode = #tpu.pipeline_mode<synchronous>, transform_indices = @transform_3, window_bounds = array<i64: 4, 72>}, {pipeline_mode = #tpu.pipeline_mode<synchronous>, transform_indices = @transform_4, window_bounds = array<i64: 4, 1>}, {pipeline_mode = #tpu.pipeline_mode<synchronous>, transform_indices = @transform_5, window_bounds = array<i64: 4, 36>}, {pipeline_mode = #tpu.pipeline_mode<synchronous>, transform_indices = @transform_6, window_bounds = array<i64: 4, 1>}, {transform_indices = @transform_7, window_bounds = array<i64: 1, 4, 256>}]} {
    %c0 = arith.constant 0 : index
    %c0_0 = arith.constant 0 : index
    %c0_1 = arith.constant 0 : index
    %0 = vector.load %arg1[%c0, %c0_0, %c0_1] : memref<1x4x324xf32, #tpu.memory_space<vmem>>, vector<1x4x324xf32>
    %1 = vector.shape_cast %0 : vector<1x4x324xf32> to vector<4x324xf32>
    %c0_2 = arith.constant 0 : index
    %c0_3 = arith.constant 0 : index
    %c0_4 = arith.constant 0 : index
    %2 = vector.load %arg2[%c0_2, %c0_3, %c0_4] : memref<1x8x324xf32, #tpu.memory_space<vmem>>, vector<1x8x324xf32>
    %3 = vector.shape_cast %2 : vector<1x8x324xf32> to vector<8x324xf32>
    %c0_5 = arith.constant 0 : index
    %c0_6 = arith.constant 0 : index
    %4 = vector.load %arg3[%c0_5, %c0_6] : memref<4x36xf32, #tpu.memory_space<vmem>>, vector<4x36xf32>
    %5 = vector.extract_strided_slice %1 {offsets = [0, 0], sizes = [4, 286], strides = [1, 1]} : vector<4x324xf32> to vector<4x286xf32>
    %6 = vector.extract_strided_slice %1 {offsets = [0, 1], sizes = [4, 286], strides = [1, 1]} : vector<4x324xf32> to vector<4x286xf32>
    %7 = vector.extract_strided_slice %1 {offsets = [0, 2], sizes = [4, 286], strides = [1, 1]} : vector<4x324xf32> to vector<4x286xf32>
    %8 = vector.extract_strided_slice %1 {offsets = [0, 18], sizes = [4, 286], strides = [1, 1]} : vector<4x324xf32> to vector<4x286xf32>
    %9 = vector.extract_strided_slice %1 {offsets = [0, 19], sizes = [4, 286], strides = [1, 1]} : vector<4x324xf32> to vector<4x286xf32>
    %10 = vector.extract_strided_slice %1 {offsets = [0, 20], sizes = [4, 286], strides = [1, 1]} : vector<4x324xf32> to vector<4x286xf32>
    %11 = vector.extract_strided_slice %1 {offsets = [0, 36], sizes = [4, 286], strides = [1, 1]} : vector<4x324xf32> to vector<4x286xf32>
    %12 = vector.extract_strided_slice %1 {offsets = [0, 37], sizes = [4, 286], strides = [1, 1]} : vector<4x324xf32> to vector<4x286xf32>
    %13 = vector.extract_strided_slice %1 {offsets = [0, 38], sizes = [4, 286], strides = [1, 1]} : vector<4x324xf32> to vector<4x286xf32>
    %14 = vector.shape_cast %5 : vector<4x286xf32> to vector<1x4x286xf32>
    %15 = vector.shape_cast %6 : vector<4x286xf32> to vector<1x4x286xf32>
    %16 = vector.shape_cast %7 : vector<4x286xf32> to vector<1x4x286xf32>
    %17 = vector.shape_cast %8 : vector<4x286xf32> to vector<1x4x286xf32>
    %18 = vector.shape_cast %9 : vector<4x286xf32> to vector<1x4x286xf32>
    %19 = vector.shape_cast %10 : vector<4x286xf32> to vector<1x4x286xf32>
    %20 = vector.shape_cast %11 : vector<4x286xf32> to vector<1x4x286xf32>
    %21 = vector.shape_cast %12 : vector<4x286xf32> to vector<1x4x286xf32>
    %22 = vector.shape_cast %13 : vector<4x286xf32> to vector<1x4x286xf32>
    %23 = tpu.concatenate %14, %15, %16, %17, %18, %19, %20, %21, %22 in 0 : vector<1x4x286xf32>, vector<1x4x286xf32>, vector<1x4x286xf32>, vector<1x4x286xf32>, vector<1x4x286xf32>, vector<1x4x286xf32>, vector<1x4x286xf32>, vector<1x4x286xf32>, vector<1x4x286xf32> -> vector<9x4x286xf32>
    %24 = vector.shape_cast %23 : vector<9x4x286xf32> to vector<36x286xf32>
    %cst = arith.constant dense<0.000000e+00> : vector<4x286xf32>
    %25 = tpu.matmul %4, %24, %cst {dimension_numbers = #tpu.dot_dimension_numbers<[1], [0], [0], [1], [0, 0, 1, 1], [], []>} : vector<4x36xf32>, vector<36x286xf32>, vector<4x286xf32> -> vector<4x286xf32>
    %c0_7 = arith.constant 0 : index
    %c0_8 = arith.constant 0 : index
    %26 = vector.load %arg4[%c0_7, %c0_8] : memref<4x72xf32, #tpu.memory_space<vmem>>, vector<4x72xf32>
    %27 = vector.extract_strided_slice %3 {offsets = [0, 0], sizes = [8, 286], strides = [1, 1]} : vector<8x324xf32> to vector<8x286xf32>
    %28 = vector.extract_strided_slice %3 {offsets = [0, 1], sizes = [8, 286], strides = [1, 1]} : vector<8x324xf32> to vector<8x286xf32>
    %29 = vector.extract_strided_slice %3 {offsets = [0, 2], sizes = [8, 286], strides = [1, 1]} : vector<8x324xf32> to vector<8x286xf32>
    %30 = vector.extract_strided_slice %3 {offsets = [0, 18], sizes = [8, 286], strides = [1, 1]} : vector<8x324xf32> to vector<8x286xf32>
    %31 = vector.extract_strided_slice %3 {offsets = [0, 19], sizes = [8, 286], strides = [1, 1]} : vector<8x324xf32> to vector<8x286xf32>
    %32 = vector.extract_strided_slice %3 {offsets = [0, 20], sizes = [8, 286], strides = [1, 1]} : vector<8x324xf32> to vector<8x286xf32>
    %33 = vector.extract_strided_slice %3 {offsets = [0, 36], sizes = [8, 286], strides = [1, 1]} : vector<8x324xf32> to vector<8x286xf32>
    %34 = vector.extract_strided_slice %3 {offsets = [0, 37], sizes = [8, 286], strides = [1, 1]} : vector<8x324xf32> to vector<8x286xf32>
    %35 = vector.extract_strided_slice %3 {offsets = [0, 38], sizes = [8, 286], strides = [1, 1]} : vector<8x324xf32> to vector<8x286xf32>
    %36 = vector.shape_cast %27 : vector<8x286xf32> to vector<1x8x286xf32>
    %37 = vector.shape_cast %28 : vector<8x286xf32> to vector<1x8x286xf32>
    %38 = vector.shape_cast %29 : vector<8x286xf32> to vector<1x8x286xf32>
    %39 = vector.shape_cast %30 : vector<8x286xf32> to vector<1x8x286xf32>
    %40 = vector.shape_cast %31 : vector<8x286xf32> to vector<1x8x286xf32>
    %41 = vector.shape_cast %32 : vector<8x286xf32> to vector<1x8x286xf32>
    %42 = vector.shape_cast %33 : vector<8x286xf32> to vector<1x8x286xf32>
    %43 = vector.shape_cast %34 : vector<8x286xf32> to vector<1x8x286xf32>
    %44 = vector.shape_cast %35 : vector<8x286xf32> to vector<1x8x286xf32>
    %45 = tpu.concatenate %36, %37, %38, %39, %40, %41, %42, %43, %44 in 0 : vector<1x8x286xf32>, vector<1x8x286xf32>, vector<1x8x286xf32>, vector<1x8x286xf32>, vector<1x8x286xf32>, vector<1x8x286xf32>, vector<1x8x286xf32>, vector<1x8x286xf32>, vector<1x8x286xf32> -> vector<9x8x286xf32>
    %46 = vector.shape_cast %45 : vector<9x8x286xf32> to vector<72x286xf32>
    %cst_9 = arith.constant dense<0.000000e+00> : vector<4x286xf32>
    %47 = tpu.matmul %26, %46, %cst_9 {dimension_numbers = #tpu.dot_dimension_numbers<[1], [0], [0], [1], [0, 0, 1, 1], [], []>} : vector<4x72xf32>, vector<72x286xf32>, vector<4x286xf32> -> vector<4x286xf32>
    %48 = arith.addf %25, %47 : vector<4x286xf32>
    %c0_10 = arith.constant 0 : index
    %c0_11 = arith.constant 0 : index
    %49 = vector.load %arg5[%c0_10, %c0_11] : memref<4x1xf32, #tpu.memory_space<vmem>>, vector<4x1xf32>
    %50 = vector.broadcast %49 : vector<4x1xf32> to vector<4x286xf32>
    %51 = arith.addf %48, %50 : vector<4x286xf32>
    %cst_12 = arith.constant 0.000000e+00 : f32
    %52 = vector.broadcast %cst_12 : f32 to vector<4x286xf32>
    %53 = arith.maximumf %51, %52 : vector<4x286xf32>
    %54 = vector.extract_strided_slice %53 {offsets = [0, 19], sizes = [4, 1], strides = [1, 1]} : vector<4x286xf32> to vector<4x1xf32>
    %55 = vector.extract_strided_slice %53 {offsets = [0, 18], sizes = [4, 16], strides = [1, 1]} : vector<4x286xf32> to vector<4x16xf32>
    %56 = vector.extract_strided_slice %53 {offsets = [0, 32], sizes = [4, 1], strides = [1, 1]} : vector<4x286xf32> to vector<4x1xf32>
    %57 = vector.extract_strided_slice %53 {offsets = [0, 1], sizes = [4, 1], strides = [1, 1]} : vector<4x286xf32> to vector<4x1xf32>
    %58 = vector.extract_strided_slice %53 {offsets = [0, 0], sizes = [4, 16], strides = [1, 1]} : vector<4x286xf32> to vector<4x16xf32>
    %59 = vector.extract_strided_slice %53 {offsets = [0, 14], sizes = [4, 1], strides = [1, 1]} : vector<4x286xf32> to vector<4x1xf32>
    %60 = vector.extract_strided_slice %53 {offsets = [0, 19], sizes = [4, 1], strides = [1, 1]} : vector<4x286xf32> to vector<4x1xf32>
    %61 = vector.extract_strided_slice %53 {offsets = [0, 18], sizes = [4, 16], strides = [1, 1]} : vector<4x286xf32> to vector<4x16xf32>
    %62 = vector.extract_strided_slice %53 {offsets = [0, 32], sizes = [4, 1], strides = [1, 1]} : vector<4x286xf32> to vector<4x1xf32>
    %63 = vector.extract_strided_slice %53 {offsets = [0, 37], sizes = [4, 1], strides = [1, 1]} : vector<4x286xf32> to vector<4x1xf32>
    %64 = vector.extract_strided_slice %53 {offsets = [0, 36], sizes = [4, 16], strides = [1, 1]} : vector<4x286xf32> to vector<4x16xf32>
    %65 = vector.extract_strided_slice %53 {offsets = [0, 50], sizes = [4, 1], strides = [1, 1]} : vector<4x286xf32> to vector<4x1xf32>
    %66 = vector.extract_strided_slice %53 {offsets = [0, 55], sizes = [4, 1], strides = [1, 1]} : vector<4x286xf32> to vector<4x1xf32>
    %67 = vector.extract_strided_slice %53 {offsets = [0, 54], sizes = [4, 16], strides = [1, 1]} : vector<4x286xf32> to vector<4x16xf32>
    %68 = vector.extract_strided_slice %53 {offsets = [0, 68], sizes = [4, 1], strides = [1, 1]} : vector<4x286xf32> to vector<4x1xf32>
    %69 = vector.extract_strided_slice %53 {offsets = [0, 73], sizes = [4, 1], strides = [1, 1]} : vector<4x286xf32> to vector<4x1xf32>
    %70 = vector.extract_strided_slice %53 {offsets = [0, 72], sizes = [4, 16], strides = [1, 1]} : vector<4x286xf32> to vector<4x16xf32>
    %71 = vector.extract_strided_slice %53 {offsets = [0, 86], sizes = [4, 1], strides = [1, 1]} : vector<4x286xf32> to vector<4x1xf32>
    %72 = vector.extract_strided_slice %53 {offsets = [0, 91], sizes = [4, 1], strides = [1, 1]} : vector<4x286xf32> to vector<4x1xf32>
    %73 = vector.extract_strided_slice %53 {offsets = [0, 90], sizes = [4, 16], strides = [1, 1]} : vector<4x286xf32> to vector<4x16xf32>
    %74 = vector.extract_strided_slice %53 {offsets = [0, 104], sizes = [4, 1], strides = [1, 1]} : vector<4x286xf32> to vector<4x1xf32>
    %75 = vector.extract_strided_slice %53 {offsets = [0, 109], sizes = [4, 1], strides = [1, 1]} : vector<4x286xf32> to vector<4x1xf32>
    %76 = vector.extract_strided_slice %53 {offsets = [0, 108], sizes = [4, 16], strides = [1, 1]} : vector<4x286xf32> to vector<4x16xf32>
    %77 = vector.extract_strided_slice %53 {offsets = [0, 122], sizes = [4, 1], strides = [1, 1]} : vector<4x286xf32> to vector<4x1xf32>
    %78 = vector.extract_strided_slice %53 {offsets = [0, 127], sizes = [4, 1], strides = [1, 1]} : vector<4x286xf32> to vector<4x1xf32>
    %79 = vector.extract_strided_slice %53 {offsets = [0, 126], sizes = [4, 16], strides = [1, 1]} : vector<4x286xf32> to vector<4x16xf32>
    %80 = vector.extract_strided_slice %53 {offsets = [0, 140], sizes = [4, 1], strides = [1, 1]} : vector<4x286xf32> to vector<4x1xf32>
    %81 = vector.extract_strided_slice %53 {offsets = [0, 145], sizes = [4, 1], strides = [1, 1]} : vector<4x286xf32> to vector<4x1xf32>
    %82 = vector.extract_strided_slice %53 {offsets = [0, 144], sizes = [4, 16], strides = [1, 1]} : vector<4x286xf32> to vector<4x16xf32>
    %83 = vector.extract_strided_slice %53 {offsets = [0, 158], sizes = [4, 1], strides = [1, 1]} : vector<4x286xf32> to vector<4x1xf32>
    %84 = vector.extract_strided_slice %53 {offsets = [0, 163], sizes = [4, 1], strides = [1, 1]} : vector<4x286xf32> to vector<4x1xf32>
    %85 = vector.extract_strided_slice %53 {offsets = [0, 162], sizes = [4, 16], strides = [1, 1]} : vector<4x286xf32> to vector<4x16xf32>
    %86 = vector.extract_strided_slice %53 {offsets = [0, 176], sizes = [4, 1], strides = [1, 1]} : vector<4x286xf32> to vector<4x1xf32>
    %87 = vector.extract_strided_slice %53 {offsets = [0, 181], sizes = [4, 1], strides = [1, 1]} : vector<4x286xf32> to vector<4x1xf32>
    %88 = vector.extract_strided_slice %53 {offsets = [0, 180], sizes = [4, 16], strides = [1, 1]} : vector<4x286xf32> to vector<4x16xf32>
    %89 = vector.extract_strided_slice %53 {offsets = [0, 194], sizes = [4, 1], strides = [1, 1]} : vector<4x286xf32> to vector<4x1xf32>
    %90 = vector.extract_strided_slice %53 {offsets = [0, 199], sizes = [4, 1], strides = [1, 1]} : vector<4x286xf32> to vector<4x1xf32>
    %91 = vector.extract_strided_slice %53 {offsets = [0, 198], sizes = [4, 16], strides = [1, 1]} : vector<4x286xf32> to vector<4x16xf32>
    %92 = vector.extract_strided_slice %53 {offsets = [0, 212], sizes = [4, 1], strides = [1, 1]} : vector<4x286xf32> to vector<4x1xf32>
    %93 = vector.extract_strided_slice %53 {offsets = [0, 217], sizes = [4, 1], strides = [1, 1]} : vector<4x286xf32> to vector<4x1xf32>
    %94 = vector.extract_strided_slice %53 {offsets = [0, 216], sizes = [4, 16], strides = [1, 1]} : vector<4x286xf32> to vector<4x16xf32>
    %95 = vector.extract_strided_slice %53 {offsets = [0, 230], sizes = [4, 1], strides = [1, 1]} : vector<4x286xf32> to vector<4x1xf32>
    %96 = vector.extract_strided_slice %53 {offsets = [0, 235], sizes = [4, 1], strides = [1, 1]} : vector<4x286xf32> to vector<4x1xf32>
    %97 = vector.extract_strided_slice %53 {offsets = [0, 234], sizes = [4, 16], strides = [1, 1]} : vector<4x286xf32> to vector<4x16xf32>
    %98 = vector.extract_strided_slice %53 {offsets = [0, 248], sizes = [4, 1], strides = [1, 1]} : vector<4x286xf32> to vector<4x1xf32>
    %99 = vector.extract_strided_slice %53 {offsets = [0, 253], sizes = [4, 1], strides = [1, 1]} : vector<4x286xf32> to vector<4x1xf32>
    %100 = vector.extract_strided_slice %53 {offsets = [0, 252], sizes = [4, 16], strides = [1, 1]} : vector<4x286xf32> to vector<4x16xf32>
    %101 = vector.extract_strided_slice %53 {offsets = [0, 266], sizes = [4, 1], strides = [1, 1]} : vector<4x286xf32> to vector<4x1xf32>
    %102 = vector.extract_strided_slice %53 {offsets = [0, 271], sizes = [4, 1], strides = [1, 1]} : vector<4x286xf32> to vector<4x1xf32>
    %103 = vector.extract_strided_slice %53 {offsets = [0, 270], sizes = [4, 16], strides = [1, 1]} : vector<4x286xf32> to vector<4x16xf32>
    %104 = vector.extract_strided_slice %53 {offsets = [0, 284], sizes = [4, 1], strides = [1, 1]} : vector<4x286xf32> to vector<4x1xf32>
    %105 = vector.extract_strided_slice %53 {offsets = [0, 253], sizes = [4, 1], strides = [1, 1]} : vector<4x286xf32> to vector<4x1xf32>
    %106 = vector.extract_strided_slice %53 {offsets = [0, 252], sizes = [4, 16], strides = [1, 1]} : vector<4x286xf32> to vector<4x16xf32>
    %107 = vector.extract_strided_slice %53 {offsets = [0, 266], sizes = [4, 1], strides = [1, 1]} : vector<4x286xf32> to vector<4x1xf32>
    %108 = tpu.concatenate %54, %55, %56, %57, %58, %59, %60, %61, %62, %63, %64, %65, %66, %67, %68, %69 in 1 : vector<4x1xf32>, vector<4x16xf32>, vector<4x1xf32>, vector<4x1xf32>, vector<4x16xf32>, vector<4x1xf32>, vector<4x1xf32>, vector<4x16xf32>, vector<4x1xf32>, vector<4x1xf32>, vector<4x16xf32>, vector<4x1xf32>, vector<4x1xf32>, vector<4x16xf32>, vector<4x1xf32>, vector<4x1xf32> -> vector<4x91xf32>
    %109 = tpu.concatenate %70, %71, %72, %73, %74, %75, %76, %77, %78, %79, %80, %81, %82, %83, %84, %85 in 1 : vector<4x16xf32>, vector<4x1xf32>, vector<4x1xf32>, vector<4x16xf32>, vector<4x1xf32>, vector<4x1xf32>, vector<4x16xf32>, vector<4x1xf32>, vector<4x1xf32>, vector<4x16xf32>, vector<4x1xf32>, vector<4x1xf32>, vector<4x16xf32>, vector<4x1xf32>, vector<4x1xf32>, vector<4x16xf32> -> vector<4x106xf32>
    %110 = tpu.concatenate %86, %87, %88, %89, %90, %91, %92, %93, %94, %95, %96, %97, %98, %99, %100, %101 in 1 : vector<4x1xf32>, vector<4x1xf32>, vector<4x16xf32>, vector<4x1xf32>, vector<4x1xf32>, vector<4x16xf32>, vector<4x1xf32>, vector<4x1xf32>, vector<4x16xf32>, vector<4x1xf32>, vector<4x1xf32>, vector<4x16xf32>, vector<4x1xf32>, vector<4x1xf32>, vector<4x16xf32>, vector<4x1xf32> -> vector<4x91xf32>
    %111 = tpu.concatenate %102, %103, %104, %105, %106, %107 in 1 : vector<4x1xf32>, vector<4x16xf32>, vector<4x1xf32>, vector<4x1xf32>, vector<4x16xf32>, vector<4x1xf32> -> vector<4x36xf32>
    %112 = tpu.concatenate %108, %109, %110, %111 in 1 : vector<4x91xf32>, vector<4x106xf32>, vector<4x91xf32>, vector<4x36xf32> -> vector<4x324xf32>
    %c0_13 = arith.constant 0 : index
    %c0_14 = arith.constant 0 : index
    %113 = vector.load %arg6[%c0_13, %c0_14] : memref<4x36xf32, #tpu.memory_space<vmem>>, vector<4x36xf32>
    %114 = vector.extract_strided_slice %112 {offsets = [0, 0], sizes = [4, 286], strides = [1, 1]} : vector<4x324xf32> to vector<4x286xf32>
    %115 = vector.extract_strided_slice %112 {offsets = [0, 1], sizes = [4, 286], strides = [1, 1]} : vector<4x324xf32> to vector<4x286xf32>
    %116 = vector.extract_strided_slice %112 {offsets = [0, 2], sizes = [4, 286], strides = [1, 1]} : vector<4x324xf32> to vector<4x286xf32>
    %117 = vector.extract_strided_slice %112 {offsets = [0, 18], sizes = [4, 286], strides = [1, 1]} : vector<4x324xf32> to vector<4x286xf32>
    %118 = vector.extract_strided_slice %112 {offsets = [0, 19], sizes = [4, 286], strides = [1, 1]} : vector<4x324xf32> to vector<4x286xf32>
    %119 = vector.extract_strided_slice %112 {offsets = [0, 20], sizes = [4, 286], strides = [1, 1]} : vector<4x324xf32> to vector<4x286xf32>
    %120 = vector.extract_strided_slice %112 {offsets = [0, 36], sizes = [4, 286], strides = [1, 1]} : vector<4x324xf32> to vector<4x286xf32>
    %121 = vector.extract_strided_slice %112 {offsets = [0, 37], sizes = [4, 286], strides = [1, 1]} : vector<4x324xf32> to vector<4x286xf32>
    %122 = vector.extract_strided_slice %112 {offsets = [0, 38], sizes = [4, 286], strides = [1, 1]} : vector<4x324xf32> to vector<4x286xf32>
    %123 = vector.shape_cast %114 : vector<4x286xf32> to vector<1x4x286xf32>
    %124 = vector.shape_cast %115 : vector<4x286xf32> to vector<1x4x286xf32>
    %125 = vector.shape_cast %116 : vector<4x286xf32> to vector<1x4x286xf32>
    %126 = vector.shape_cast %117 : vector<4x286xf32> to vector<1x4x286xf32>
    %127 = vector.shape_cast %118 : vector<4x286xf32> to vector<1x4x286xf32>
    %128 = vector.shape_cast %119 : vector<4x286xf32> to vector<1x4x286xf32>
    %129 = vector.shape_cast %120 : vector<4x286xf32> to vector<1x4x286xf32>
    %130 = vector.shape_cast %121 : vector<4x286xf32> to vector<1x4x286xf32>
    %131 = vector.shape_cast %122 : vector<4x286xf32> to vector<1x4x286xf32>
    %132 = tpu.concatenate %123, %124, %125, %126, %127, %128, %129, %130, %131 in 0 : vector<1x4x286xf32>, vector<1x4x286xf32>, vector<1x4x286xf32>, vector<1x4x286xf32>, vector<1x4x286xf32>, vector<1x4x286xf32>, vector<1x4x286xf32>, vector<1x4x286xf32>, vector<1x4x286xf32> -> vector<9x4x286xf32>
    %133 = vector.shape_cast %132 : vector<9x4x286xf32> to vector<36x286xf32>
    %cst_15 = arith.constant dense<0.000000e+00> : vector<4x286xf32>
    %134 = tpu.matmul %113, %133, %cst_15 {dimension_numbers = #tpu.dot_dimension_numbers<[1], [0], [0], [1], [0, 0, 1, 1], [], []>} : vector<4x36xf32>, vector<36x286xf32>, vector<4x286xf32> -> vector<4x286xf32>
    %c0_16 = arith.constant 0 : index
    %c0_17 = arith.constant 0 : index
    %135 = vector.load %arg7[%c0_16, %c0_17] : memref<4x1xf32, #tpu.memory_space<vmem>>, vector<4x1xf32>
    %136 = vector.broadcast %135 : vector<4x1xf32> to vector<4x286xf32>
    %137 = arith.addf %134, %136 : vector<4x286xf32>
    %cst_18 = arith.constant 0.000000e+00 : f32
    %138 = vector.broadcast %cst_18 : f32 to vector<4x286xf32>
    %139 = arith.maximumf %137, %138 : vector<4x286xf32>
    %140 = vector.extract_strided_slice %139 {offsets = [0, 0], sizes = [4, 16], strides = [1, 1]} : vector<4x286xf32> to vector<4x16xf32>
    %141 = vector.extract_strided_slice %139 {offsets = [0, 18], sizes = [4, 16], strides = [1, 1]} : vector<4x286xf32> to vector<4x16xf32>
    %142 = vector.extract_strided_slice %139 {offsets = [0, 36], sizes = [4, 16], strides = [1, 1]} : vector<4x286xf32> to vector<4x16xf32>
    %143 = vector.extract_strided_slice %139 {offsets = [0, 54], sizes = [4, 16], strides = [1, 1]} : vector<4x286xf32> to vector<4x16xf32>
    %144 = vector.extract_strided_slice %139 {offsets = [0, 72], sizes = [4, 16], strides = [1, 1]} : vector<4x286xf32> to vector<4x16xf32>
    %145 = vector.extract_strided_slice %139 {offsets = [0, 90], sizes = [4, 16], strides = [1, 1]} : vector<4x286xf32> to vector<4x16xf32>
    %146 = vector.extract_strided_slice %139 {offsets = [0, 108], sizes = [4, 16], strides = [1, 1]} : vector<4x286xf32> to vector<4x16xf32>
    %147 = vector.extract_strided_slice %139 {offsets = [0, 126], sizes = [4, 16], strides = [1, 1]} : vector<4x286xf32> to vector<4x16xf32>
    %148 = vector.extract_strided_slice %139 {offsets = [0, 144], sizes = [4, 16], strides = [1, 1]} : vector<4x286xf32> to vector<4x16xf32>
    %149 = vector.extract_strided_slice %139 {offsets = [0, 162], sizes = [4, 16], strides = [1, 1]} : vector<4x286xf32> to vector<4x16xf32>
    %150 = vector.extract_strided_slice %139 {offsets = [0, 180], sizes = [4, 16], strides = [1, 1]} : vector<4x286xf32> to vector<4x16xf32>
    %151 = vector.extract_strided_slice %139 {offsets = [0, 198], sizes = [4, 16], strides = [1, 1]} : vector<4x286xf32> to vector<4x16xf32>
    %152 = vector.extract_strided_slice %139 {offsets = [0, 216], sizes = [4, 16], strides = [1, 1]} : vector<4x286xf32> to vector<4x16xf32>
    %153 = vector.extract_strided_slice %139 {offsets = [0, 234], sizes = [4, 16], strides = [1, 1]} : vector<4x286xf32> to vector<4x16xf32>
    %154 = vector.extract_strided_slice %139 {offsets = [0, 252], sizes = [4, 16], strides = [1, 1]} : vector<4x286xf32> to vector<4x16xf32>
    %155 = vector.extract_strided_slice %139 {offsets = [0, 270], sizes = [4, 16], strides = [1, 1]} : vector<4x286xf32> to vector<4x16xf32>
    %156 = tpu.concatenate %140, %141, %142, %143, %144, %145, %146, %147, %148, %149, %150, %151, %152, %153, %154, %155 in 1 : vector<4x16xf32>, vector<4x16xf32>, vector<4x16xf32>, vector<4x16xf32>, vector<4x16xf32>, vector<4x16xf32>, vector<4x16xf32>, vector<4x16xf32>, vector<4x16xf32>, vector<4x16xf32>, vector<4x16xf32>, vector<4x16xf32>, vector<4x16xf32>, vector<4x16xf32>, vector<4x16xf32>, vector<4x16xf32> -> vector<4x256xf32>
    %c0_19 = arith.constant 0 : index
    %c0_20 = arith.constant 0 : index
    %c0_21 = arith.constant 0 : index
    %157 = vector.load %arg8[%c0_19, %c0_20, %c0_21] : memref<1x4x256xf32, #tpu.memory_space<vmem>>, vector<1x4x256xf32>
    %158 = vector.shape_cast %157 : vector<1x4x256xf32> to vector<4x256xf32>
    %159 = vector.shape_cast %156 : vector<4x256xf32> to vector<1x4x256xf32>
    tpu.vector_store %arg8[%c0_19, %c0_20, %c0_21], %159 {strides = array<i32>} : memref<1x4x256xf32, #tpu.memory_space<vmem>>, vector<1x4x256xf32>,
    return
  }
  func.func @transform_0(%arg0: i32) -> (i32, i32, i32) {
    %c0_i32 = arith.constant 0 : i32
    %c0_i32_0 = arith.constant 0 : i32
    %c0_i32_1 = arith.constant 0 : i32
    return %arg0, %c0_i32, %c0_i32_0 : i32, i32, i32
  }
  func.func @transform_1(%arg0: i32) -> (i32, i32, i32) {
    %c0_i32 = arith.constant 0 : i32
    %c0_i32_0 = arith.constant 0 : i32
    %c0_i32_1 = arith.constant 0 : i32
    return %arg0, %c0_i32, %c0_i32_0 : i32, i32, i32
  }
  func.func @transform_2(%arg0: i32) -> (i32, i32) {
    %c0_i32 = arith.constant 0 : i32
    %c0_i32_0 = arith.constant 0 : i32
    %c0_i32_1 = arith.constant 0 : i32
    return %c0_i32, %c0_i32_0 : i32, i32
  }
  func.func @transform_3(%arg0: i32) -> (i32, i32) {
    %c0_i32 = arith.constant 0 : i32
    %c0_i32_0 = arith.constant 0 : i32
    %c0_i32_1 = arith.constant 0 : i32
    return %c0_i32, %c0_i32_0 : i32, i32
  }
  func.func @transform_4(%arg0: i32) -> (i32, i32) {
    %c0_i32 = arith.constant 0 : i32
    %c0_i32_0 = arith.constant 0 : i32
    %c0_i32_1 = arith.constant 0 : i32
    return %c0_i32, %c0_i32_0 : i32, i32
  }
  func.func @transform_5(%arg0: i32) -> (i32, i32) {
    %c0_i32 = arith.constant 0 : i32
    %c0_i32_0 = arith.constant 0 : i32
    %c0_i32_1 = arith.constant 0 : i32
    return %c0_i32, %c0_i32_0 : i32, i32
  }
  func.func @transform_6(%arg0: i32) -> (i32, i32) {
    %c0_i32 = arith.constant 0 : i32
    %c0_i32_0 = arith.constant 0 : i32
    %c0_i32_1 = arith.constant 0 : i32
    return %c0_i32, %c0_i32_0 : i32, i32
  }
  func.func @transform_7(%arg0: i32) -> (i32, i32, i32) {
    %c0_i32 = arith.constant 0 : i32
    %c0_i32_0 = arith.constant 0 : i32
    %c0_i32_1 = arith.constant 0 : i32
    return %arg0, %c0_i32, %c0_i32_0 : i32, i32, i32
  }
}

</mosaic_0001>

<llo_original>
// kernel: decode_block_forward.1
$region0: #{decode_block_forward.1}
  #allocation0 [shape = 'u32[]', space=smem, size = 0x4, offset = 0x4, fixed_abs, tag = 'smem constant byte address 0x4 - core index']
  #allocation1 [shape = 'u32[144,128]{1,0:T(1,128)}', space=vmem, size = 0x12000, scoped, tag = 'internal scratch']
  %s0 = inlined_call_operand.vmem [shape: f32[2,4,324], index: 0, kind: input, shape index: {}]
  %s1 = inlined_call_operand.vmem [shape: f32[2,8,324], index: 1, kind: input, shape index: {}]
  %s2 = inlined_call_operand.vmem [shape: f32[4,36], index: 2, kind: input, shape index: {}]
  %s3 = inlined_call_operand.vmem [shape: f32[4,72], index: 3, kind: input, shape index: {}]
  %s4 = inlined_call_operand.vmem [shape: f32[4,1], index: 4, kind: input, shape index: {}]
  %s5 = inlined_call_operand.vmem [shape: f32[4,36], index: 5, kind: input, shape index: {}]
  %s6 = inlined_call_operand.vmem [shape: f32[4,1], index: 6, kind: input, shape index: {}]
  %s7 = inlined_call_operand.vmem [shape: f32[2,4,256], index: 7, kind: output, shape index: {}]
  %s8 = sld [smem:[#allocation0]]
  $region61: #{decode_block_forward.1} parent=0
    _
  %s10 = ssub.s32 1, %s8
  %s11 = scalar_select 0, %s10, %s8
  loop: start=0, step=1, limit=4
  $region2: #{decode_block_forward.1} parent=0 // loop_pre_header
    _
  $region3: #{decode_block_forward.1} parent=0 // loop_header
    %s13 = sphi 0, %s17
    %p14 = scmp.ge.s32.totalorder %s13, 4
    %s23 = sphi 0, %s25
    %s26 = sphi 0, %s23
    %s27 = sphi 0, %s26
    %s43 = sphi 0, %s27
    %s49 = sphi 0, %s51
    %s52 = sphi 0, %s49
    %s53 = sphi 0, %s52
    %s69 = sphi 0, %s53
    %s73 = sphi 0, %s73
    %s75 = sphi 0, %s73
    %s76 = sphi 0, %s75
    %s90 = sphi 0, %s76
    %s94 = sphi 0, %s94
    %s96 = sphi 0, %s94
    %s97 = sphi 0, %s96
    %s111 = sphi 0, %s97
    %s115 = sphi 0, %s115
    %s117 = sphi 0, %s115
    %s118 = sphi 0, %s117
    %s132 = sphi 0, %s118
    %s136 = sphi 0, %s136
    %s138 = sphi 0, %s136
    %s139 = sphi 0, %s138
    %s153 = sphi 0, %s139
    %s157 = sphi 0, %s157
    %s159 = sphi 0, %s157
    %s160 = sphi 0, %s159
    %s174 = sphi 0, %s160
    %s180 = sphi 0, %s182
    %s183 = sphi 0, %s180
    %s184 = sphi 0, %s183
    %s200 = sphi 0, %s184
  $region4: #{decode_block_forward.1} parent=0 // loop_header_branch
    %16 = sbr.rel (%p14) target = $region8
  $region5: #{decode_block_forward.1} parent=0 // loop_body
    %s18 = ssub.s32 %s13, 1
    %s19 = ssub.s32 %s13, 2
    %s20 = sadd.s32 %s13, 1
    %s21 = ssub.s32 %s13, %s20
    %p22 = scmp.eq.s32.totalorder %s21, 0
    %s24 = sadd.s32 %s23, 1
    %s25 = scalar_select %p22, %s23, %s24
    %p28 = pneg %p22
    %p29 = scmp.eq.s32.totalorder %s13, 1
    %p30 = por %p28, %p29
    %p31 = scmp.ne.s32.totalorder %s23, %s26
    %p32 = scmp.eq.s32.totalorder %s13, 0
    %p33 = por %p31, %p32
    %p34 = scmp.ne.s32.totalorder %s23, %s26
    %p35 = scmp.eq.s32.totalorder %s18, 1
    %p36 = por %p34, %p35
    %p37 = scmp.ne.s32.totalorder %s26, %s27
    %p38 = scmp.eq.s32.totalorder %s18, 0
    %p39 = por %p37, %p38
    %p40 = scmp.ne.s32.totalorder %s26, %s27
    %p41 = scmp.eq.s32.totalorder %s19, 1
    %p42 = por %p40, %p41
    %p44 = scmp.ne.s32.totalorder %s27, %s43
    %p45 = scmp.eq.s32.totalorder %s19, 0
    %p46 = por %p44, %p45
    %s47 = ssub.s32 %s13, %s20
    %p48 = scmp.eq.s32.totalorder %s47, 0
    %s50 = sadd.s32 %s49, 1
    %s51 = scalar_select %p48, %s49, %s50
    %p54 = pneg %p48
    %p55 = scmp.eq.s32.totalorder %s13, 1
    %p56 = por %p54, %p55
    %p57 = scmp.ne.s32.totalorder %s49, %s52
    %p58 = scmp.eq.s32.totalorder %s13, 0
    %p59 = por %p57, %p58
    %p60 = scmp.ne.s32.totalorder %s49, %s52
    %p61 = scmp.eq.s32.totalorder %s18, 1
    %p62 = por %p60, %p61
    %p63 = scmp.ne.s32.totalorder %s52, %s53
    %p64 = scmp.eq.s32.totalorder %s18, 0
    %p65 = por %p63, %p64
    %p66 = scmp.ne.s32.totalorder %s52, %s53
    %p67 = scmp.eq.s32.totalorder %s19, 1
    %p68 = por %p66, %p67
    %p70 = scmp.ne.s32.totalorder %s53, %s69
    %p71 = scmp.eq.s32.totalorder %s19, 0
    %p72 = por %p70, %p71
    %s74 = sadd.s32 %s73, 1
    %p77 = scmp.eq.s32.totalorder %s13, 1
    %p78 = scmp.ne.s32.totalorder %s73, %s75
    %p79 = scmp.eq.s32.totalorder %s13, 0
    %p80 = por %p78, %p79
    %p81 = scmp.ne.s32.totalorder %s73, %s75
    %p82 = scmp.eq.s32.totalorder %s18, 1
    %p83 = por %p81, %p82
    %p84 = scmp.ne.s32.totalorder %s75, %s76
    %p85 = scmp.eq.s32.totalorder %s18, 0
    %p86 = por %p84, %p85
    %p87 = scmp.ne.s32.totalorder %s75, %s76
    %p88 = scmp.eq.s32.totalorder %s19, 1
    %p89 = por %p87, %p88
    %p91 = scmp.ne.s32.totalorder %s76, %s90
    %p92 = scmp.eq.s32.totalorder %s19, 0
    %p93 = por %p91, %p92
    %s95 = sadd.s32 %s94, 1
    %p98 = scmp.eq.s32.totalorder %s13, 1
    %p99 = scmp.ne.s32.totalorder %s94, %s96
    %p100 = scmp.eq.s32.totalorder %s13, 0
    %p101 = por %p99, %p100
    %p102 = scmp.ne.s32.totalorder %s94, %s96
    %p103 = scmp.eq.s32.totalorder %s18, 1
    %p104 = por %p102, %p103
    %p105 = scmp.ne.s32.totalorder %s96, %s97
    %p106 = scmp.eq.s32.totalorder %s18, 0
    %p107 = por %p105, %p106
    %p108 = scmp.ne.s32.totalorder %s96, %s97
    %p109 = scmp.eq.s32.totalorder %s19, 1
    %p110 = por %p108, %p109
    %p112 = scmp.ne.s32.totalorder %s97, %s111
    %p113 = scmp.eq.s32.totalorder %s19, 0
    %p114 = por %p112, %p113
    %s116 = sadd.s32 %s115, 1
    %p119 = scmp.eq.s32.totalorder %s13, 1
    %p120 = scmp.ne.s32.totalorder %s115, %s117
    %p121 = scmp.eq.s32.totalorder %s13, 0
    %p122 = por %p120, %p121
    %p123 = scmp.ne.s32.totalorder %s115, %s117
    %p124 = scmp.eq.s32.totalorder %s18, 1
    %p125 = por %p123, %p124
    %p126 = scmp.ne.s32.totalorder %s117, %s118
    %p127 = scmp.eq.s32.totalorder %s18, 0
    %p128 = por %p126, %p127
    %p129 = scmp.ne.s32.totalorder %s117, %s118
    %p130 = scmp.eq.s32.totalorder %s19, 1
    %p131 = por %p129, %p130
    %p133 = scmp.ne.s32.totalorder %s118, %s132
    %p134 = scmp.eq.s32.totalorder %s19, 0
    %p135 = por %p133, %p134
    %s137 = sadd.s32 %s136, 1
    %p140 = scmp.eq.s32.totalorder %s13, 1
    %p141 = scmp.ne.s32.totalorder %s136, %s138
    %p142 = scmp.eq.s32.totalorder %s13, 0
    %p143 = por %p141, %p142
    %p144 = scmp.ne.s32.totalorder %s136, %s138
    %p145 = scmp.eq.s32.totalorder %s18, 1
    %p146 = por %p144, %p145
    %p147 = scmp.ne.s32.totalorder %s138, %s139
    %p148 = scmp.eq.s32.totalorder %s18, 0
    %p149 = por %p147, %p148
    %p150 = scmp.ne.s32.totalorder %s138, %s139
    %p151 = scmp.eq.s32.totalorder %s19, 1
    %p152 = por %p150, %p151
    %p154 = scmp.ne.s32.totalorder %s139, %s153
    %p155 = scmp.eq.s32.totalorder %s19, 0
    %p156 = por %p154, %p155
    %s158 = sadd.s32 %s157, 1
    %p161 = scmp.eq.s32.totalorder %s13, 1
    %p162 = scmp.ne.s32.totalorder %s157, %s159
    %p163 = scmp.eq.s32.totalorder %s13, 0
    %p164 = por %p162, %p163
    %p165 = scmp.ne.s32.totalorder %s157, %s159
    %p166 = scmp.eq.s32.totalorder %s18, 1
    %p167 = por %p165, %p166
    %p168 = scmp.ne.s32.totalorder %s159, %s160
    %p169 = scmp.eq.s32.totalorder %s18, 0
    %p170 = por %p168, %p169
    %p171 = scmp.ne.s32.totalorder %s159, %s160
    %p172 = scmp.eq.s32.totalorder %s19, 1
    %p173 = por %p171, %p172
    %p175 = scmp.ne.s32.totalorder %s160, %s174
    %p176 = scmp.eq.s32.totalorder %s19, 0
    %p177 = por %p175, %p176
    %s178 = ssub.s32 %s13, %s20
    %p179 = scmp.eq.s32.totalorder %s178, 0
    %s181 = sadd.s32 %s180, 1
    %s182 = scalar_select %p179, %s180, %s181
    %p185 = pneg %p179
    %p186 = scmp.eq.s32.totalorder %s13, 1
    %p187 = por %p185, %p186
    %p188 = scmp.ne.s32.totalorder %s180, %s183
    %p189 = scmp.eq.s32.totalorder %s13, 0
    %p190 = por %p188, %p189
    %p191 = scmp.ne.s32.totalorder %s180, %s183
    %p192 = scmp.eq.s32.totalorder %s18, 1
    %p193 = por %p191, %p192
    %p194 = scmp.ne.s32.totalorder %s183, %s184
    %p195 = scmp.eq.s32.totalorder %s18, 0
    %p196 = por %p194, %p195
    %p197 = scmp.ne.s32.totalorder %s183, %s184
    %p198 = scmp.eq.s32.totalorder %s19, 1
    %p199 = por %p197, %p198
    %p201 = scmp.ne.s32.totalorder %s184, %s200
    %p202 = scmp.eq.s32.totalorder %s19, 0
    %p203 = por %p201, %p202
    %p204 = scmp.le.s32.totalorder 1, %s13
    %p205 = scmp.lt.s32.totalorder %s13, 3
    %p206 = pnand %p204, %p205
    %p207 = pneg %p206
    // Predicated region
    $region9: #{decode_block_forward.1} parent=5 // pred_check
      _
    $region10: #{decode_block_forward.1} parent=5 // pred_check_branch
      %209 = sbr.rel (%p206) target = $region12
    $region11: #{decode_block_forward.1} parent=5 // pred_region
      %s210 = ssub.s32 %s13, 1
      // Predicated region
      $region13: #{decode_block_forward.1} parent=11 // pred_check
        %p211 = pneg %p86
      $region14: #{decode_block_forward.1} parent=11 // pred_check_branch
        %213 = sbr.rel (%p211) target = $region16
      $region15: #{decode_block_forward.1} parent=11 // pred_region
        _
      $region16: #{decode_block_forward.1} parent=11 // pred_fallthru
        _
      // Predicated region
      $region17: #{decode_block_forward.1} parent=11 // pred_check
        %p214 = pneg %p107
      $region18: #{decode_block_forward.1} parent=11 // pred_check_branch
        %216 = sbr.rel (%p214) target = $region20
      $region19: #{decode_block_forward.1} parent=11 // pred_region
        _
      $region20: #{decode_block_forward.1} parent=11 // pred_fallthru
        _
      // Predicated region
      $region21: #{decode_block_forward.1} parent=11 // pred_check
        %p217 = pneg %p128
      $region22: #{decode_block_forward.1} parent=11 // pred_check_branch
        %219 = sbr.rel (%p217) target = $region24
      $region23: #{decode_block_forward.1} parent=11 // pred_region
        _
      $region24: #{decode_block_forward.1} parent=11 // pred_fallthru
        _
      // Predicated region
      $region25: #{decode_block_forward.1} parent=11 // pred_check
        %p220 = pneg %p149
      $region26: #{decode_block_forward.1} parent=11 // pred_check_branch
        %222 = sbr.rel (%p220) target = $region28
      $region27: #{decode_block_forward.1} parent=11 // pred_region
        _
      $region28: #{decode_block_forward.1} parent=11 // pred_fallthru
        _
      // Predicated region
      $region29: #{decode_block_forward.1} parent=11 // pred_check
        %p223 = pneg %p170
      $region30: #{decode_block_forward.1} parent=11 // pred_check_branch
        %225 = sbr.rel (%p223) target = $region32
      $region31: #{decode_block_forward.1} parent=11 // pred_region
        _
      $region32: #{decode_block_forward.1} parent=11 // pred_fallthru
        _
    $region12: #{decode_block_forward.1} parent=5 // pred_fallthru
      _
    %p226 = scmp.lt.s32.totalorder %s13, 2
    // Predicated region
    $region33: #{decode_block_forward.1} parent=5 // pred_check
      %p227 = pneg %p226
    $region34: #{decode_block_forward.1} parent=5 // pred_check_branch
      %229 = sbr.rel (%p227) target = $region36
    $region35: #{decode_block_forward.1} parent=5 // pred_region
      // Predicated region
      $region37: #{decode_block_forward.1} parent=35 // pred_check
        %p230 = pneg %p33
      $region38: #{decode_block_forward.1} parent=35 // pred_check_branch
        %232 = sbr.rel (%p230) target = $region40
      $region39: #{decode_block_forward.1} parent=35 // pred_region
        %p233 = scmp.lt.s32.totalorder %s13, 1
        %s234 = scalar_select %p233, %s13, 1
        %s235 = smul.addr %s234, 3
        %s236 = smul.addr %s235, 4
        %s237 = scalar_lea.vmem %s0, %s236
      $region40: #{decode_block_forward.1} parent=35 // pred_fallthru
        _
      // Predicated region
      $region41: #{decode_block_forward.1} parent=35 // pred_check
        %p238 = pneg %p59
      $region42: #{decode_block_forward.1} parent=35 // pred_check_branch
        %240 = sbr.rel (%p238) target = $region44
      $region43: #{decode_block_forward.1} parent=35 // pred_region
        %p241 = scmp.lt.s32.totalorder %s13, 1
        %s242 = scalar_select %p241, %s13, 1
        %s243 = smul.addr %s242, 3
        %s244 = smul.addr %s243, 8
        %s245 = scalar_lea.vmem %s1, %s244
      $region44: #{decode_block_forward.1} parent=35 // pred_fallthru
        _
    $region36: #{decode_block_forward.1} parent=5 // pred_fallthru
      _
    %p246 = scmp.le.s32.totalorder 1, %s13
    %p247 = scmp.lt.s32.totalorder %s13, 3
    %p248 = pnand %p246, %p247
    %p249 = pneg %p248
    // Predicated region
    $region45: #{decode_block_forward.1} parent=5 // pred_check
      _
    $region46: #{decode_block_forward.1} parent=5 // pred_check_branch
      %251 = sbr.rel (%p248) target = $region48
    $region47: #{decode_block_forward.1} parent=5 // pred_region
      %s252 = ssub.s32 %s13, 1
      %p253 = scmp.lt.s32.totalorder %s18, 1
      %s254 = scalar_select %p253, %s18, 1
      %s255 = smul.addr %s254, 3
      %s256 = smul.addr %s255, 4
      %s257 = scalar_lea.vmem %s0, %s256
      %p258 = pneg %p39
      %p259 = pneg %p36
      %p260 = scmp.lt.s32.totalorder %s18, 1
      %s261 = scalar_select %p260, %s18, 1
      %s262 = smul.addr %s261, 3
      %s263 = smul.addr %s262, 8
      %s264 = scalar_lea.vmem %s1, %s263
      %p265 = pneg %p65
      %p266 = pneg %p62
      %p267 = pneg %p86
      %p268 = pneg %p83
      %p269 = pneg %p107
      %p270 = pneg %p104
      %p271 = pneg %p128
      %p272 = pneg %p125
      %p273 = pneg %p149
      %p274 = pneg %p146
      %p275 = pneg %p170
      %p276 = pneg %p167
      %p277 = pneg %p196
      %p278 = pneg %p193
      %p279 = scmp.lt.s32.totalorder %s18, 1
      %s280 = scalar_select %p279, %s18, 1
      %s281 = smul.addr %s280, 2
      %s282 = smul.addr %s281, 4
      %s283 = scalar_lea.vmem %s7, %s282
      %p284 = scmp.lt.s32.totalorder %s18, 1
      %s285 = scalar_select %p284, %s18, 1
      %s286 = smul.addr %s285, 3
      %s287 = smul.addr %s286, 4
      %s288 = scalar_lea.vmem %s0, %s287
      %p289 = scmp.lt.s32.totalorder %s18, 1
      %s290 = scalar_select %p289, %s18, 1
      %s291 = smul.addr %s290, 3
      %s292 = smul.addr %s291, 8
      %s293 = scalar_lea.vmem %s1, %s292
      %p294 = scmp.lt.s32.totalorder %s18, 1
      %s295 = scalar_select %p294, %s18, 1
      %s296 = smul.addr %s295, 2
      %s297 = smul.addr %s296, 4
      %s298 = scalar_lea.vmem %s7, %s297
      %v299 = vld [vmem:[%s288] sm:$0xff]
      %v300 = vld [vmem:[%s288 + $0x8] sm:$0xf]
      %v301 = vld [vmem:[%s293] sm:$0xff]
      %v302 = vld [vmem:[%s293 + $0x8] sm:$0xff]
      %v303 = vld [vmem:[%s293 + $0x10] sm:$0xff]
      %v304 = vld [vmem:[%s2] sm:$0xf]
      %307 = vrot.lane.b32.xlu0 %v299, 127
      %v308 = vpop.permute.xlu0 %307
      %309 = vrot.lane.b32.xlu0 %v300, 127
      %v310 = vpop.permute.xlu0 %309
      %v311 = vrot.slane %v308, 4
      %v312 = vrot.slane %v310, 4
      %vm313 = vcmask 1043456
      %v314 = vsel %vm313, %v311, %v312
      %vm315 = vcmask 1039360
      %v316 = vsel %vm315, %v308, %v314
      %317 = vrot.lane.b32.xlu0 %v299, 126
      %v318 = vpop.permute.xlu0 %317
      %319 = vrot.lane.b32.xlu0 %v300, 126
      %v320 = vpop.permute.xlu0 %319
      %v321 = vrot.slane %v318, 4
      %v322 = vrot.slane %v320, 4
      %v323 = vsel %vm313, %v321, %v322
      %vm324 = vcmask 1031168
      %v325 = vsel %vm324, %v318, %v323
      %326 = vrot.lane.b32.xlu0 %v299, 110
      %v327 = vpop.permute.xlu0 %326
      %328 = vrot.lane.b32.xlu0 %v300, 110
      %v329 = vpop.permute.xlu0 %328
      %v330 = vrot.slane %v327, 4
      %v331 = vrot.slane %v329, 4
      %v332 = vsel %vm313, %v330, %v331
      %vm333 = vcmask 900096
      %v334 = vsel %vm333, %v327, %v332
      %335 = vrot.lane.b32.xlu0 %v299, 109
      %v336 = vpop.permute.xlu0 %335
      %337 = vrot.lane.b32.xlu0 %v300, 109
      %v338 = vpop.permute.xlu0 %337
      %v339 = vrot.slane %v336, 4
      %v340 = vrot.slane %v338, 4
      %v341 = vsel %vm313, %v339, %v340
      %vm342 = vcmask 891904
      %v343 = vsel %vm342, %v336, %v341
      %344 = vrot.lane.b32.xlu0 %v299, 108
      %v345 = vpop.permute.xlu0 %344
      %346 = vrot.lane.b32.xlu0 %v300, 108
      %v347 = vpop.permute.xlu0 %346
      %v348 = vrot.slane %v345, 4
      %v349 = vrot.slane %v347, 4
      %v350 = vsel %vm313, %v348, %v349
      %vm351 = vcmask 883712
      %v352 = vsel %vm351, %v345, %v350
      %353 = vrot.lane.b32.xlu0 %v299, 92
      %v354 = vpop.permute.xlu0 %353
      %355 = vrot.lane.b32.xlu0 %v300, 92
      %v356 = vpop.permute.xlu0 %355
      %v357 = vrot.slane %v354, 4
      %v358 = vrot.slane %v356, 4
      %v359 = vsel %vm313, %v357, %v358
      %vm360 = vcmask 752640
      %v361 = vsel %vm360, %v354, %v359
      %362 = vrot.lane.b32.xlu0 %v299, 91
      %v363 = vpop.permute.xlu0 %362
      %364 = vrot.lane.b32.xlu0 %v300, 91
      %v365 = vpop.permute.xlu0 %364
      %v366 = vrot.slane %v363, 4
      %v367 = vrot.slane %v365, 4
      %v368 = vsel %vm313, %v366, %v367
      %vm369 = vcmask 744448
      %v370 = vsel %vm369, %v363, %v368
      %371 = vrot.lane.b32.xlu0 %v299, 90
      %v372 = vpop.permute.xlu0 %371
      %373 = vrot.lane.b32.xlu0 %v300, 90
      %v374 = vpop.permute.xlu0 %373
      %v375 = vrot.slane %v372, 4
      %v376 = vrot.slane %v374, 4
      %v377 = vsel %vm313, %v375, %v376
      %vm378 = vcmask 736256
      %v379 = vsel %vm378, %v372, %v377
      %v380 = vld [vmem:[%s3] sm:$0xf]
      %384 = vrot.lane.b32.xlu0 %v301, 127
      %v385 = vpop.permute.xlu0 %384
      %386 = vrot.lane.b32.xlu0 %v302, 127
      %v387 = vpop.permute.xlu0 %386
      %388 = vrot.lane.b32.xlu0 %v303, 127
      %v389 = vpop.permute.xlu0 %388
      %v390 = vsel %vm315, %v385, %v387
      %v391 = vsel %vm315, %v387, %v389
      %395 = vrot.lane.b32.xlu0 %v301, 126
      %v396 = vpop.permute.xlu0 %395
      %397 = vrot.lane.b32.xlu0 %v302, 126
      %v398 = vpop.permute.xlu0 %397
      %399 = vrot.lane.b32.xlu0 %v303, 126
      %v400 = vpop.permute.xlu0 %399
      %v401 = vsel %vm324, %v396, %v398
      %v402 = vsel %vm324, %v398, %v400
      %406 = vrot.lane.b32.xlu0 %v301, 110
      %v407 = vpop.permute.xlu0 %406
      %408 = vrot.lane.b32.xlu0 %v302, 110
      %v409 = vpop.permute.xlu0 %408
      %410 = vrot.lane.b32.xlu0 %v303, 110
      %v411 = vpop.permute.xlu0 %410
      %v412 = vsel %vm333, %v407, %v409
      %v413 = vsel %vm333, %v409, %v411
      %417 = vrot.lane.b32.xlu0 %v301, 109
      %v418 = vpop.permute.xlu0 %417
      %419 = vrot.lane.b32.xlu0 %v302, 109
      %v420 = vpop.permute.xlu0 %419
      %421 = vrot.lane.b32.xlu0 %v303, 109
      %v422 = vpop.permute.xlu0 %421
      %v423 = vsel %vm342, %v418, %v420
      %v424 = vsel %vm342, %v420, %v422
      %428 = vrot.lane.b32.xlu0 %v301, 108
      %v429 = vpop.permute.xlu0 %428
      %430 = vrot.lane.b32.xlu0 %v302, 108
      %v431 = vpop.permute.xlu0 %430
      %432 = vrot.lane.b32.xlu0 %v303, 108
      %v433 = vpop.permute.xlu0 %432
      %v434 = vsel %vm351, %v429, %v431
      %v435 = vsel %vm351, %v431, %v433
      %439 = vrot.lane.b32.xlu0 %v301, 92
      %v440 = vpop.permute.xlu0 %439
      %441 = vrot.lane.b32.xlu0 %v302, 92
      %v442 = vpop.permute.xlu0 %441
      %443 = vrot.lane.b32.xlu0 %v303, 92
      %v444 = vpop.permute.xlu0 %443
      %v445 = vsel %vm360, %v440, %v442
      %v446 = vsel %vm360, %v442, %v444
      %450 = vrot.lane.b32.xlu0 %v301, 91
      %v451 = vpop.permute.xlu0 %450
      %452 = vrot.lane.b32.xlu0 %v302, 91
      %v453 = vpop.permute.xlu0 %452
      %454 = vrot.lane.b32.xlu0 %v303, 91
      %v455 = vpop.permute.xlu0 %454
      %v456 = vsel %vm369, %v451, %v453
      %v457 = vsel %vm369, %v453, %v455
      %461 = vrot.lane.b32.xlu0 %v301, 90
      %v462 = vpop.permute.xlu0 %461
      %463 = vrot.lane.b32.xlu0 %v302, 90
      %v464 = vpop.permute.xlu0 %463
      %465 = vrot.lane.b32.xlu0 %v303, 90
      %v466 = vpop.permute.xlu0 %465
      %v467 = vsel %vm378, %v462, %v464
      %v468 = vsel %vm378, %v464, %v466
      %vm472 = vcmask 588800
      %v474 = vsel %vm472, %v380, 0
      %476 = vmatprep.subr.mxu0 %v302
      %477 = vmatpush1.msra.mxu0 %v301
      %478 = vmatprep.subr.mxu0 %v391
      %479 = vmatpush1.msra.mxu0 %v390
      %480 = vmatprep.subr.mxu0 %v402
      %481 = vmatpush1.msra.mxu0 %v401
      %482 = vmatprep.subr.mxu0 %v413
      %483 = vmatpush1.msra.mxu0 %v412
      %484 = vmatprep.subr.mxu0 %v424
      %485 = vmatpush1.msra.mxu0 %v423
      %486 = vmatprep.subr.mxu0 %v435
      %487 = vmatpush1.msra.mxu0 %v434
      %488 = vmatprep.subr.mxu0 %v446
      %489 = vmatpush1.msra.mxu0 %v445
      %490 = vmatprep.subr.mxu0 %v457
      %491 = vmatpush1.msra.mxu0 %v456
      %492 = vmatprep.subr.mxu0 %v468
      %493 = vmatpush1.msra.mxu0 %v467
      %494 = vmatprep.subr.mxu0 0.0
      %495 = vmatpush1.msra.mxu0 0.0
      %496 = vmatprep.subr.mxu0 0.0
      %497 = vmatpush1.msra.mxu0 0.0
      %498 = vmatprep.subr.mxu0 0.0
      %499 = vmatpush1.msra.mxu0 0.0
      %500 = vmatprep.subr.mxu0 0.0
      %501 = vmatpush1.msra.mxu0 0.0
      %502 = vmatprep.subr.mxu0 0.0
      %503 = vmatpush1.msra.mxu0 0.0
      %504 = vmatprep.subr.mxu0 0.0
      %505 = vmatpush1.msra.mxu0 0.0
      %506 = vmatprep.subr.mxu0 0.0
      %507 = vmatpush1.msra.mxu0 0.0
      %508 = vmatprep.subr.mxu0 0.0
      %509 = vmatpush1.msra.mxu0 0.0
      %510 = vmatprep.subr.mxu0 0.0
      %511 = vmatpush1.msra.mxu0 0.0
      %512 = vmatprep.subr.mxu0 0.0
      %513 = vmatpush1.msra.mxu0 0.0
      %514 = vmatprep.subr.mxu0 0.0
      %515 = vmatpush1.msra.mxu0 0.0
      %516 = vmatprep.subr.mxu0 0.0
      %517 = vmatpush1.msra.mxu0 0.0
      %518 = vmatprep.subr.mxu0 0.0
      %519 = vmatpush1.msra.mxu0 0.0
      %520 = vmatprep.subr.mxu0 0.0
      %521 = vmatpush1.msra.mxu0 0.0
      %522 = vmatprep.subr.mxu0 0.0
      %523 = vmatpush1.msra.mxu0 0.0
      %524 = vmatprep.subr.mxu0 0.0
      %525 = vmatpush1.msra.mxu0 0.0
      %526 = vmatprep.subr.mxu0 0.0
      %527 = vmatpush1.msra.mxu0 0.0
      %528 = vmatprep.subr.mxu0 0.0
      %529 = vmatpush1.msra.mxu0 0.0
      %530 = vmatprep.subr.mxu0 0.0
      %531 = vmatpush1.msra.mxu0 0.0
      %532 = vmatprep.subr.mxu0 0.0
      %533 = vmatpush1.msra.mxu0 0.0
      %534 = vmatprep.subr.mxu0 0.0
      %535 = vmatpush1.msra.mxu0 0.0
      %536 = vmatprep.subr.mxu0 0.0
      %537 = vmatpush1.msra.mxu0 0.0
      %538 = vmatprep.subr.mxu0 0.0
      %539 = vmatpush1.msra.mxu0 0.0
      %540 = vmatprep.mubr.f32.mxu0 0.0
      %541 = vmatmul.mubr.f32.gmra.mrb[0].mxu0 %v474
      %v542 = vpop.f32.mrb[0].mxu0
      %v543 = vadd.f32 0.0, %v542
      %v544 = vpop.f32.mrb[0].mxu0
      %v545 = vadd.f32 0.0, %v544
      %546 = vdwg.mxu0
      %547 = vmatprep.subr.mxu0 0.0
      %548 = vmatpush1.msra.mxu0 %v303
      %549 = vmatprep.subr.mxu0 0.0
      %550 = vmatpush1.msra.mxu0 %v389
      %551 = vmatprep.subr.mxu0 0.0
      %552 = vmatpush1.msra.mxu0 %v400
      %553 = vmatprep.subr.mxu0 0.0
      %554 = vmatpush1.msra.mxu0 %v411
      %555 = vmatprep.subr.mxu0 0.0
      %556 = vmatpush1.msra.mxu0 %v422
      %557 = vmatprep.subr.mxu0 0.0
      %558 = vmatpush1.msra.mxu0 %v433
      %559 = vmatprep.subr.mxu0 0.0
      %560 = vmatpush1.msra.mxu0 %v444
      %561 = vmatprep.subr.mxu0 0.0
      %562 = vmatpush1.msra.mxu0 %v455
      %563 = vmatprep.subr.mxu0 0.0
      %564 = vmatpush1.msra.mxu0 %v466
      %565 = vmatprep.subr.mxu0 0.0
      %566 = vmatpush1.msra.mxu0 0.0
      %567 = vmatprep.subr.mxu0 0.0
      %568 = vmatpush1.msra.mxu0 0.0
      %569 = vmatprep.subr.mxu0 0.0
      %570 = vmatpush1.msra.mxu0 0.0
      %571 = vmatprep.subr.mxu0 0.0
      %572 = vmatpush1.msra.mxu0 0.0
      %573 = vmatprep.subr.mxu0 0.0
      %574 = vmatpush1.msra.mxu0 0.0
      %575 = vmatprep.subr.mxu0 0.0
      %576 = vmatpush1.msra.mxu0 0.0
      %577 = vmatprep.subr.mxu0 0.0
      %578 = vmatpush1.msra.mxu0 0.0
      %579 = vmatprep.subr.mxu0 0.0
      %580 = vmatpush1.msra.mxu0 0.0
      %581 = vmatprep.subr.mxu0 0.0
      %582 = vmatpush1.msra.mxu0 0.0
      %583 = vmatprep.subr.mxu0 0.0
      %584 = vmatpush1.msra.mxu0 0.0
      %585 = vmatprep.subr.mxu0 0.0
      %586 = vmatpush1.msra.mxu0 0.0
      %587 = vmatprep.subr.mxu0 0.0
      %588 = vmatpush1.msra.mxu0 0.0
      %589 = vmatprep.subr.mxu0 0.0
      %590 = vmatpush1.msra.mxu0 0.0
      %591 = vmatprep.subr.mxu0 0.0
      %592 = vmatpush1.msra.mxu0 0.0
      %593 = vmatprep.subr.mxu0 0.0
      %594 = vmatpush1.msra.mxu0 0.0
      %595 = vmatprep.subr.mxu0 0.0
      %596 = vmatpush1.msra.mxu0 0.0
      %597 = vmatprep.subr.mxu0 0.0
      %598 = vmatpush1.msra.mxu0 0.0
      %599 = vmatprep.subr.mxu0 0.0
      %600 = vmatpush1.msra.mxu0 0.0
      %601 = vmatprep.subr.mxu0 0.0
      %602 = vmatpush1.msra.mxu0 0.0
      %603 = vmatprep.subr.mxu0 0.0
      %604 = vmatpush1.msra.mxu0 0.0
      %605 = vmatprep.subr.mxu0 0.0
      %606 = vmatpush1.msra.mxu0 0.0
      %607 = vmatprep.subr.mxu0 0.0
      %608 = vmatpush1.msra.mxu0 0.0
      %609 = vmatprep.subr.mxu0 0.0
      %610 = vmatpush1.msra.mxu0 0.0
      %611 = vmatprep.mubr.f32.mxu0 0.0
      %612 = vmatmul.mubr.f32.gmra.mrb[0].mxu0 %v474
      %v613 = vpop.f32.mrb[0].mxu0
      %v614 = vadd.f32 0.0, %v613
      %v615 = vpop.f32.mrb[0].mxu0
      %616 = vdwg.mxu0
      %v617 = vcombine.low %v299, %v316
      %v618 = vcombine.high %v299, %v316
      %v619 = vcombine.low %v300, %v310
      %v620 = vcombine.low %v325, %v334
      %v621 = vcombine.high %v325, %v334
      %v622 = vcombine.low %v320, %v329
      %v623 = vcombine.low %v343, %v352
      %v624 = vcombine.high %v343, %v352
      %v625 = vcombine.low %v338, %v347
      %v626 = vcombine.low %v361, %v370
      %v627 = vcombine.high %v361, %v370
      %v628 = vcombine.low %v356, %v365
      %v629 = vcombine.high %v379, %v379
      %vm642 = vcmask 293888
      %v644 = vsel %vm642, %v304, 0
      %v646 = vsel %vm313, %v379, 0
      %v648 = vsel %vm313, %v629, 0
      %v650 = vsel %vm313, %v374, 0
      %652 = vmatprep.subr.mxu0 %v618
      %653 = vmatpush1.msra.mxu0 %v617
      %654 = vmatprep.subr.mxu0 %v621
      %655 = vmatpush1.msra.mxu0 %v620
      %656 = vmatprep.subr.mxu0 %v624
      %657 = vmatpush1.msra.mxu0 %v623
      %658 = vmatprep.subr.mxu0 %v627
      %659 = vmatpush1.msra.mxu0 %v626
      %660 = vmatprep.subr.mxu0 %v648
      %661 = vmatpush1.msra.mxu0 %v646
      %662 = vmatprep.subr.mxu0 0.0
      %663 = vmatpush1.msra.mxu0 0.0
      %664 = vmatprep.subr.mxu0 0.0
      %665 = vmatpush1.msra.mxu0 0.0
      %666 = vmatprep.subr.mxu0 0.0
      %667 = vmatpush1.msra.mxu0 0.0
      %668 = vmatprep.subr.mxu0 0.0
      %669 = vmatpush1.msra.mxu0 0.0
      %670 = vmatprep.subr.mxu0 0.0
      %671 = vmatpush1.msra.mxu0 0.0
      %672 = vmatprep.subr.mxu0 0.0
      %673 = vmatpush1.msra.mxu0 0.0
      %674 = vmatprep.subr.mxu0 0.0
      %675 = vmatpush1.msra.mxu0 0.0
      %676 = vmatprep.subr.mxu0 0.0
      %677 = vmatpush1.msra.mxu0 0.0
      %678 = vmatprep.subr.mxu0 0.0
      %679 = vmatpush1.msra.mxu0 0.0
      %680 = vmatprep.subr.mxu0 0.0
      %681 = vmatpush1.msra.mxu0 0.0
      %682 = vmatprep.subr.mxu0 0.0
      %683 = vmatpush1.msra.mxu0 0.0
      %684 = vmatprep.subr.mxu0 0.0
      %685 = vmatpush1.msra.mxu0 0.0
      %686 = vmatprep.subr.mxu0 0.0
      %687 = vmatpush1.msra.mxu0 0.0
      %688 = vmatprep.subr.mxu0 0.0
      %689 = vmatpush1.msra.mxu0 0.0
      %690 = vmatprep.subr.mxu0 0.0
      %691 = vmatpush1.msra.mxu0 0.0
      %692 = vmatprep.subr.mxu0 0.0
      %693 = vmatpush1.msra.mxu0 0.0
      %694 = vmatprep.subr.mxu0 0.0
      %695 = vmatpush1.msra.mxu0 0.0
      %696 = vmatprep.subr.mxu0 0.0
      %697 = vmatpush1.msra.mxu0 0.0
      %698 = vmatprep.subr.mxu0 0.0
      %699 = vmatpush1.msra.mxu0 0.0
      %700 = vmatprep.subr.mxu0 0.0
      %701 = vmatpush1.msra.mxu0 0.0
      %702 = vmatprep.subr.mxu0 0.0
      %703 = vmatpush1.msra.mxu0 0.0
      %704 = vmatprep.subr.mxu0 0.0
      %705 = vmatpush1.msra.mxu0 0.0
      %706 = vmatprep.subr.mxu0 0.0
      %707 = vmatpush1.msra.mxu0 0.0
      %708 = vmatprep.subr.mxu0 0.0
      %709 = vmatpush1.msra.mxu0 0.0
      %710 = vmatprep.subr.mxu0 0.0
      %711 = vmatpush1.msra.mxu0 0.0
      %712 = vmatprep.subr.mxu0 0.0
      %713 = vmatpush1.msra.mxu0 0.0
      %714 = vmatprep.subr.mxu0 0.0
      %715 = vmatpush1.msra.mxu0 0.0
      %716 = vmatprep.mubr.f32.mxu0 0.0
      %717 = vmatmul.mubr.f32.gmra.mrb[0].mxu0 %v644
      %v718 = vpop.f32.mrb[0].mxu0
      %v719 = vadd.f32 %v543, %v718
      %v720 = vpop.f32.mrb[0].mxu0
      %v721 = vadd.f32 %v545, %v720
      %722 = vdwg.mxu0
      %723 = vmatprep.subr.mxu0 0.0
      %724 = vmatpush1.msra.mxu0 %v619
      %725 = vmatprep.subr.mxu0 0.0
      %726 = vmatpush1.msra.mxu0 %v622
      %727 = vmatprep.subr.mxu0 0.0
      %728 = vmatpush1.msra.mxu0 %v625
      %729 = vmatprep.subr.mxu0 0.0
      %730 = vmatpush1.msra.mxu0 %v628
      %731 = vmatprep.subr.mxu0 0.0
      %732 = vmatpush1.msra.mxu0 %v650
      %733 = vmatprep.subr.mxu0 0.0
      %734 = vmatpush1.msra.mxu0 0.0
      %735 = vmatprep.subr.mxu0 0.0
      %736 = vmatpush1.msra.mxu0 0.0
      %737 = vmatprep.subr.mxu0 0.0
      %738 = vmatpush1.msra.mxu0 0.0
      %739 = vmatprep.subr.mxu0 0.0
      %740 = vmatpush1.msra.mxu0 0.0
      %741 = vmatprep.subr.mxu0 0.0
      %742 = vmatpush1.msra.mxu0 0.0
      %743 = vmatprep.subr.mxu0 0.0
      %744 = vmatpush1.msra.mxu0 0.0
      %745 = vmatprep.subr.mxu0 0.0
      %746 = vmatpush1.msra.mxu0 0.0
      %747 = vmatprep.subr.mxu0 0.0
      %748 = vmatpush1.msra.mxu0 0.0
      %749 = vmatprep.subr.mxu0 0.0
      %750 = vmatpush1.msra.mxu0 0.0
      %751 = vmatprep.subr.mxu0 0.0
      %752 = vmatpush1.msra.mxu0 0.0
      %753 = vmatprep.subr.mxu0 0.0
      %754 = vmatpush1.msra.mxu0 0.0
      %755 = vmatprep.subr.mxu0 0.0
      %756 = vmatpush1.msra.mxu0 0.0
      %757 = vmatprep.subr.mxu0 0.0
      %758 = vmatpush1.msra.mxu0 0.0
      %759 = vmatprep.subr.mxu0 0.0
      %760 = vmatpush1.msra.mxu0 0.0
      %761 = vmatprep.subr.mxu0 0.0
      %762 = vmatpush1.msra.mxu0 0.0
      %763 = vmatprep.subr.mxu0 0.0
      %764 = vmatpush1.msra.mxu0 0.0
      %765 = vmatprep.subr.mxu0 0.0
      %766 = vmatpush1.msra.mxu0 0.0
      %767 = vmatprep.subr.mxu0 0.0
      %768 = vmatpush1.msra.mxu0 0.0
      %769 = vmatprep.subr.mxu0 0.0
      %770 = vmatpush1.msra.mxu0 0.0
      %771 = vmatprep.subr.mxu0 0.0
      %772 = vmatpush1.msra.mxu0 0.0
      %773 = vmatprep.subr.mxu0 0.0
      %774 = vmatpush1.msra.mxu0 0.0
      %775 = vmatprep.subr.mxu0 0.0
      %776 = vmatpush1.msra.mxu0 0.0
      %777 = vmatprep.subr.mxu0 0.0
      %778 = vmatpush1.msra.mxu0 0.0
      %779 = vmatprep.subr.mxu0 0.0
      %780 = vmatpush1.msra.mxu0 0.0
      %781 = vmatprep.subr.mxu0 0.0
      %782 = vmatpush1.msra.mxu0 0.0
      %783 = vmatprep.subr.mxu0 0.0
      %784 = vmatpush1.msra.mxu0 0.0
      %785 = vmatprep.subr.mxu0 0.0
      %786 = vmatpush1.msra.mxu0 0.0
      %787 = vmatprep.mubr.f32.mxu0 0.0
      %788 = vmatmul.mubr.f32.gmra.mrb[0].mxu0 %v644
      %v789 = vpop.f32.mrb[0].mxu0
      %v790 = vadd.f32 %v614, %v789
      %v791 = vpop.f32.mrb[0].mxu0
      %792 = vdwg.mxu0
      %v793 = vld [vmem:[%s4] sm:$0xf]
      %795 = vset.pattern.permute.xlu0 0
      %796 = vperm.xlu0 %795, %v793
      %v797 = vpop.permute.xlu0 %796
      %v799 = vadd.f32 %v719, %v797
      %v800 = vadd.f32 %v721, %v797
      %v801 = vadd.f32 %v790, %v797
      %v802 = vmax.f32 %v799, 0.0
      %v803 = vmax.f32 %v800, 0.0
      %v804 = vmax.f32 %v801, 0.0
      %806 = vrot.lane.b32.xlu0 %v802, 109
      %v807 = vpop.permute.xlu0 %806
      %809 = vrot.lane.b32.xlu0 %v802, 111
      %v810 = vpop.permute.xlu0 %809
      %812 = vrot.lane.b32.xlu0 %v802, 113
      %v813 = vpop.permute.xlu0 %812
      %815 = vrot.lane.b32.xlu0 %v802, 17
      %v816 = vpop.permute.xlu0 %815
      %818 = vrot.lane.b32.xlu0 %v802, 19
      %v819 = vpop.permute.xlu0 %818
      %821 = vrot.lane.b32.xlu0 %v802, 21
      %v822 = vpop.permute.xlu0 %821
      %vm824 = vcmask 7168
      %v825 = vsel %vm824, %v807, %v810
      %vm826 = vcmask 138240
      %v827 = vsel %vm826, %v825, %v813
      %vm828 = vcmask 146432
      %v829 = vsel %vm828, %v827, %v816
      %vm830 = vcmask 154624
      %v831 = vsel %vm830, %v829, %v819
      %vm832 = vcmask 285696
      %v833 = vsel %vm832, %v831, %v822
      %v834 = vsel %vm642, %v833, %v816
      %vm835 = vcmask 302080
      %v836 = vsel %vm835, %v834, %v819
      %vm837 = vcmask 433152
      %v838 = vsel %vm837, %v836, %v822
      %vm839 = vcmask 441344
      %v840 = vsel %vm839, %v838, %v816
      %vm841 = vcmask 449536
      %v842 = vsel %vm841, %v840, %v819
      %vm843 = vcmask 580608
      %v844 = vsel %vm843, %v842, %v822
      %v845 = vsel %vm472, %v844, %v816
      %vm846 = vcmask 596992
      %v847 = vsel %vm846, %v845, %v819
      %vm848 = vcmask 728064
      %v849 = vsel %vm848, %v847, %v822
      %v850 = vsel %vm378, %v849, %v816
      %851 = vrot.lane.b32.xlu0 %v802, 56
      %v852 = vpop.permute.xlu0 %851
      %854 = vrot.lane.b32.xlu0 %v802, 58
      %v855 = vpop.permute.xlu0 %854
      %857 = vrot.lane.b32.xlu0 %v802, 54
      %v858 = vpop.permute.xlu0 %857
      %861 = vrot.lane.b32.xlu0 %v803, 56
      %v862 = vpop.permute.xlu0 %861
      %vm863 = vcmask 457728
      %v864 = vsel %vm863, %v852, %v862
      %866 = vrot.lane.b32.xlu0 %v803, 58
      %v867 = vpop.permute.xlu0 %866
      %869 = vrot.lane.b32.xlu0 %v803, 54
      %v870 = vpop.permute.xlu0 %869
      %vm873 = vcmask 130048
      %v874 = vsel %vm873, %v852, %v855
      %v875 = vsel %vm826, %v874, %v858
      %v876 = vsel %vm828, %v875, %v852
      %vm877 = vcmask 277504
      %v878 = vsel %vm877, %v876, %v855
      %v879 = vsel %vm832, %v878, %v858
      %v880 = vsel %vm642, %v879, %v852
      %vm881 = vcmask 424960
      %v882 = vsel %vm881, %v880, %v855
      %v883 = vsel %vm837, %v882, %v858
      %v884 = vsel %vm839, %v883, %v864
      %vm885 = vcmask 572416
      %v886 = vsel %vm885, %v884, %v867
      %v887 = vsel %vm843, %v886, %v870
      %v888 = vsel %vm472, %v887, %v862
      %vm889 = vcmask 719872
      %v890 = vsel %vm889, %v888, %v867
      %v891 = vsel %vm848, %v890, %v870
      %v892 = vsel %vm378, %v891, %v862
      %893 = vrot.lane.b32.xlu0 %v803, 80
      %v894 = vpop.permute.xlu0 %893
      %896 = vrot.lane.b32.xlu0 %v803, 76
      %v897 = vpop.permute.xlu0 %896
      %899 = vrot.lane.b32.xlu0 %v803, 78
      %v900 = vpop.permute.xlu0 %899
      %903 = vrot.lane.b32.xlu0 %v804, 78
      %v904 = vpop.permute.xlu0 %903
      %vm905 = vcmask 637952
      %v906 = vsel %vm905, %v900, %v904
      %908 = vrot.lane.b32.xlu0 %v804, 80
      %v909 = vpop.permute.xlu0 %908
      %v911 = vsel %vm824, %v894, %v897
      %vm912 = vcmask 15360
      %v913 = vsel %vm912, %v911, %v900
      %v914 = vsel %vm828, %v913, %v894
      %v915 = vsel %vm830, %v914, %v897
      %vm916 = vcmask 162816
      %v917 = vsel %vm916, %v915, %v900
      %v918 = vsel %vm642, %v917, %v894
      %v919 = vsel %vm835, %v918, %v897
      %vm920 = vcmask 310272
      %v921 = vsel %vm920, %v919, %v900
      %v922 = vsel %vm839, %v921, %v894
      %v923 = vsel %vm841, %v922, %v897
      %v924 = vsel %vm863, %v923, %v900
      %v925 = vsel %vm472, %v924, %v894
      %v926 = vsel %vm846, %v925, %v897
      %vm927 = vcmask 605184
      %v928 = vsel %vm927, %v926, %v906
      %v929 = vsel %vm378, %v928, %v909
      %930 = vrot.lane.b32.xlu0 %v804, 113
      %v931 = vpop.permute.xlu0 %930
      %933 = vrot.lane.b32.xlu0 %v804, 115
      %v934 = vpop.permute.xlu0 %933
      %936 = vrot.lane.b32.xlu0 %v804, 117
      %v937 = vpop.permute.xlu0 %936
      %939 = vrot.lane.b32.xlu0 %v803, 21
      %v940 = vpop.permute.xlu0 %939
      %942 = vrot.lane.b32.xlu0 %v803, 23
      %v943 = vpop.permute.xlu0 %942
      %944 = vrot.lane.b32.xlu0 %v804, 23
      %v945 = vpop.permute.xlu0 %944
      %vm946 = vcmask 187392
      %v947 = vsel %vm946, %v943, %v945
      %949 = vrot.lane.b32.xlu0 %v804, 25
      %v950 = vpop.permute.xlu0 %949
      %v952 = vsel %vm824, %v931, %v934
      %v953 = vsel %vm826, %v952, %v937
      %v954 = vsel %vm828, %v953, %v940
      %v955 = vsel %vm830, %v954, %v947
      %v956 = vsel %vm832, %v955, %v950
      %958 = vrot.lane.b32.xlu0 %v892, 91
      %v959 = vpop.permute.xlu0 %958
      %962 = vrot.lane.b32.xlu0 %v929, 69
      %v963 = vpop.permute.xlu0 %962
      %966 = vrot.lane.b32.xlu0 %v956, 32
      %v967 = vpop.permute.xlu0 %966
      %v969 = vsel %vm369, %v850, %v959
      %vm970 = vcmask 564224
      %v971 = vsel %vm970, %v959, %v963
      %vm972 = vcmask 261120
      %v973 = vsel %vm972, %v963, %v967
      %v974 = vld [vmem:[%s5] sm:$0xf]
      %978 = vrot.lane.b32.xlu0 %v969, 127
      %v979 = vpop.permute.xlu0 %978
      %980 = vrot.lane.b32.xlu0 %v971, 127
      %v981 = vpop.permute.xlu0 %980
      %982 = vrot.lane.b32.xlu0 %v973, 127
      %v983 = vpop.permute.xlu0 %982
      %v984 = vsel %vm315, %v979, %v981
      %v985 = vsel %vm315, %v981, %v983
      %986 = vrot.lane.b32.xlu0 %v969, 126
      %v987 = vpop.permute.xlu0 %986
      %988 = vrot.lane.b32.xlu0 %v971, 126
      %v989 = vpop.permute.xlu0 %988
      %990 = vrot.lane.b32.xlu0 %v973, 126
      %v991 = vpop.permute.xlu0 %990
      %v992 = vsel %vm324, %v987, %v989
      %v993 = vsel %vm324, %v989, %v991
      %994 = vrot.lane.b32.xlu0 %v969, 110
      %v995 = vpop.permute.xlu0 %994
      %996 = vrot.lane.b32.xlu0 %v971, 110
      %v997 = vpop.permute.xlu0 %996
      %998 = vrot.lane.b32.xlu0 %v973, 110
      %v999 = vpop.permute.xlu0 %998
      %v1000 = vsel %vm333, %v995, %v997
      %v1001 = vsel %vm333, %v997, %v999
      %1002 = vrot.lane.b32.xlu0 %v969, 109
      %v1003 = vpop.permute.xlu0 %1002
      %1004 = vrot.lane.b32.xlu0 %v971, 109
      %v1005 = vpop.permute.xlu0 %1004
      %1006 = vrot.lane.b32.xlu0 %v973, 109
      %v1007 = vpop.permute.xlu0 %1006
      %v1008 = vsel %vm342, %v1003, %v1005
      %v1009 = vsel %vm342, %v1005, %v1007
      %1010 = vrot.lane.b32.xlu0 %v969, 108
      %v1011 = vpop.permute.xlu0 %1010
      %1012 = vrot.lane.b32.xlu0 %v971, 108
      %v1013 = vpop.permute.xlu0 %1012
      %1014 = vrot.lane.b32.xlu0 %v973, 108
      %v1015 = vpop.permute.xlu0 %1014
      %v1016 = vsel %vm351, %v1011, %v1013
      %v1017 = vsel %vm351, %v1013, %v1015
      %1018 = vrot.lane.b32.xlu0 %v969, 92
      %v1019 = vpop.permute.xlu0 %1018
      %1020 = vrot.lane.b32.xlu0 %v971, 92
      %v1021 = vpop.permute.xlu0 %1020
      %1022 = vrot.lane.b32.xlu0 %v973, 92
      %v1023 = vpop.permute.xlu0 %1022
      %v1024 = vsel %vm360, %v1019, %v1021
      %v1025 = vsel %vm360, %v1021, %v1023
      %1026 = vrot.lane.b32.xlu0 %v969, 91
      %v1027 = vpop.permute.xlu0 %1026
      %1028 = vrot.lane.b32.xlu0 %v971, 91
      %v1029 = vpop.permute.xlu0 %1028
      %1030 = vrot.lane.b32.xlu0 %v973, 91
      %v1031 = vpop.permute.xlu0 %1030
      %v1032 = vsel %vm369, %v1027, %v1029
      %v1033 = vsel %vm369, %v1029, %v1031
      %1034 = vrot.lane.b32.xlu0 %v969, 90
      %v1035 = vpop.permute.xlu0 %1034
      %1036 = vrot.lane.b32.xlu0 %v971, 90
      %v1037 = vpop.permute.xlu0 %1036
      %1038 = vrot.lane.b32.xlu0 %v973, 90
      %v1039 = vpop.permute.xlu0 %1038
      %v1040 = vsel %vm378, %v1035, %v1037
      %v1041 = vsel %vm378, %v1037, %v1039
      %v1042 = vcombine.low %v969, %v971
      %v1043 = vcombine.low %v984, %v985
      %v1044 = vcombine.low %v992, %v993
      %v1045 = vcombine.low %v1000, %v1001
      %v1046 = vcombine.low %v1008, %v1009
      %v1047 = vcombine.low %v1016, %v1017
      %v1048 = vcombine.low %v1024, %v1025
      %v1049 = vcombine.low %v1032, %v1033
      %v1050 = vcombine.low %v1040, %v1041
      %v1051 = vld [vmem:[%s6] sm:$0xf]
      %1053 = vset.pattern.permute.xlu0 0
      %1054 = vperm.xlu0 %1053, %v1051
      %v1055 = vpop.permute.xlu0 %1054
      %v1057 = vcombine.low %v1042, %v1043
      %v1058 = vcombine.high %v1042, %v1043
      %v1059 = vcombine.low %v973, %v983
      %v1060 = vcombine.low %v1044, %v1045
      %v1061 = vcombine.high %v1044, %v1045
      %v1062 = vcombine.low %v991, %v999
      %v1063 = vcombine.low %v1046, %v1047
      %v1064 = vcombine.high %v1046, %v1047
      %v1065 = vcombine.low %v1007, %v1015
      %v1066 = vcombine.low %v1048, %v1049
      %v1067 = vcombine.high %v1048, %v1049
      %v1068 = vcombine.low %v1023, %v1031
      %v1069 = vcombine.high %v1050, %v1050
      %v1083 = vsel %vm642, %v974, 0
      %v1085 = vsel %vm313, %v1050, 0
      %v1087 = vsel %vm313, %v1069, 0
      %v1089 = vsel %vm313, %v1039, 0
      %1091 = vmatprep.subr.mxu0 %v1058
      %1092 = vmatpush1.msra.mxu0 %v1057
      %1093 = vmatprep.subr.mxu0 %v1061
      %1094 = vmatpush1.msra.mxu0 %v1060
      %1095 = vmatprep.subr.mxu0 %v1064
      %1096 = vmatpush1.msra.mxu0 %v1063
      %1097 = vmatprep.subr.mxu0 %v1067
      %1098 = vmatpush1.msra.mxu0 %v1066
      %1099 = vmatprep.subr.mxu0 %v1087
      %1100 = vmatpush1.msra.mxu0 %v1085
      %1101 = vmatprep.subr.mxu0 0.0
      %1102 = vmatpush1.msra.mxu0 0.0
      %1103 = vmatprep.subr.mxu0 0.0
      %1104 = vmatpush1.msra.mxu0 0.0
      %1105 = vmatprep.subr.mxu0 0.0
      %1106 = vmatpush1.msra.mxu0 0.0
      %1107 = vmatprep.subr.mxu0 0.0
      %1108 = vmatpush1.msra.mxu0 0.0
      %1109 = vmatprep.subr.mxu0 0.0
      %1110 = vmatpush1.msra.mxu0 0.0
      %1111 = vmatprep.subr.mxu0 0.0
      %1112 = vmatpush1.msra.mxu0 0.0
      %1113 = vmatprep.subr.mxu0 0.0
      %1114 = vmatpush1.msra.mxu0 0.0
      %1115 = vmatprep.subr.mxu0 0.0
      %1116 = vmatpush1.msra.mxu0 0.0
      %1117 = vmatprep.subr.mxu0 0.0
      %1118 = vmatpush1.msra.mxu0 0.0
      %1119 = vmatprep.subr.mxu0 0.0
      %1120 = vmatpush1.msra.mxu0 0.0
      %1121 = vmatprep.subr.mxu0 0.0
      %1122 = vmatpush1.msra.mxu0 0.0
      %1123 = vmatprep.subr.mxu0 0.0
      %1124 = vmatpush1.msra.mxu0 0.0
      %1125 = vmatprep.subr.mxu0 0.0
      %1126 = vmatpush1.msra.mxu0 0.0
      %1127 = vmatprep.subr.mxu0 0.0
      %1128 = vmatpush1.msra.mxu0 0.0
      %1129 = vmatprep.subr.mxu0 0.0
      %1130 = vmatpush1.msra.mxu0 0.0
      %1131 = vmatprep.subr.mxu0 0.0
      %1132 = vmatpush1.msra.mxu0 0.0
      %1133 = vmatprep.subr.mxu0 0.0
      %1134 = vmatpush1.msra.mxu0 0.0
      %1135 = vmatprep.subr.mxu0 0.0
      %1136 = vmatpush1.msra.mxu0 0.0
      %1137 = vmatprep.subr.mxu0 0.0
      %1138 = vmatpush1.msra.mxu0 0.0
      %1139 = vmatprep.subr.mxu0 0.0
      %1140 = vmatpush1.msra.mxu0 0.0
      %1141 = vmatprep.subr.mxu0 0.0
      %1142 = vmatpush1.msra.mxu0 0.0
      %1143 = vmatprep.subr.mxu0 0.0
      %1144 = vmatpush1.msra.mxu0 0.0
      %1145 = vmatprep.subr.mxu0 0.0
      %1146 = vmatpush1.msra.mxu0 0.0
      %1147 = vmatprep.subr.mxu0 0.0
      %1148 = vmatpush1.msra.mxu0 0.0
      %1149 = vmatprep.subr.mxu0 0.0
      %1150 = vmatpush1.msra.mxu0 0.0
      %1151 = vmatprep.subr.mxu0 0.0
      %1152 = vmatpush1.msra.mxu0 0.0
      %1153 = vmatprep.subr.mxu0 0.0
      %1154 = vmatpush1.msra.mxu0 0.0
      %1155 = vmatprep.mubr.f32.mxu0 0.0
      %1156 = vmatmul.mubr.f32.gmra.mrb[0].mxu0 %v1083
      %v1157 = vpop.f32.mrb[0].mxu0
      %v1158 = vadd.f32 %v1055, %v1157
      %v1159 = vpop.f32.mrb[0].mxu0
      %v1160 = vadd.f32 %v1055, %v1159
      %1161 = vdwg.mxu0
      %1162 = vmatprep.subr.mxu0 0.0
      %1163 = vmatpush1.msra.mxu0 %v1059
      %1164 = vmatprep.subr.mxu0 0.0
      %1165 = vmatpush1.msra.mxu0 %v1062
      %1166 = vmatprep.subr.mxu0 0.0
      %1167 = vmatpush1.msra.mxu0 %v1065
      %1168 = vmatprep.subr.mxu0 0.0
      %1169 = vmatpush1.msra.mxu0 %v1068
      %1170 = vmatprep.subr.mxu0 0.0
      %1171 = vmatpush1.msra.mxu0 %v1089
      %1172 = vmatprep.subr.mxu0 0.0
      %1173 = vmatpush1.msra.mxu0 0.0
      %1174 = vmatprep.subr.mxu0 0.0
      %1175 = vmatpush1.msra.mxu0 0.0
      %1176 = vmatprep.subr.mxu0 0.0
      %1177 = vmatpush1.msra.mxu0 0.0
      %1178 = vmatprep.subr.mxu0 0.0
      %1179 = vmatpush1.msra.mxu0 0.0
      %1180 = vmatprep.subr.mxu0 0.0
      %1181 = vmatpush1.msra.mxu0 0.0
      %1182 = vmatprep.subr.mxu0 0.0
      %1183 = vmatpush1.msra.mxu0 0.0
      %1184 = vmatprep.subr.mxu0 0.0
      %1185 = vmatpush1.msra.mxu0 0.0
      %1186 = vmatprep.subr.mxu0 0.0
      %1187 = vmatpush1.msra.mxu0 0.0
      %1188 = vmatprep.subr.mxu0 0.0
      %1189 = vmatpush1.msra.mxu0 0.0
      %1190 = vmatprep.subr.mxu0 0.0
      %1191 = vmatpush1.msra.mxu0 0.0
      %1192 = vmatprep.subr.mxu0 0.0
      %1193 = vmatpush1.msra.mxu0 0.0
      %1194 = vmatprep.subr.mxu0 0.0
      %1195 = vmatpush1.msra.mxu0 0.0
      %1196 = vmatprep.subr.mxu0 0.0
      %1197 = vmatpush1.msra.mxu0 0.0
      %1198 = vmatprep.subr.mxu0 0.0
      %1199 = vmatpush1.msra.mxu0 0.0
      %1200 = vmatprep.subr.mxu0 0.0
      %1201 = vmatpush1.msra.mxu0 0.0
      %1202 = vmatprep.subr.mxu0 0.0
      %1203 = vmatpush1.msra.mxu0 0.0
      %1204 = vmatprep.subr.mxu0 0.0
      %1205 = vmatpush1.msra.mxu0 0.0
      %1206 = vmatprep.subr.mxu0 0.0
      %1207 = vmatpush1.msra.mxu0 0.0
      %1208 = vmatprep.subr.mxu0 0.0
      %1209 = vmatpush1.msra.mxu0 0.0
      %1210 = vmatprep.subr.mxu0 0.0
      %1211 = vmatpush1.msra.mxu0 0.0
      %1212 = vmatprep.subr.mxu0 0.0
      %1213 = vmatpush1.msra.mxu0 0.0
      %1214 = vmatprep.subr.mxu0 0.0
      %1215 = vmatpush1.msra.mxu0 0.0
      %1216 = vmatprep.subr.mxu0 0.0
      %1217 = vmatpush1.msra.mxu0 0.0
      %1218 = vmatprep.subr.mxu0 0.0
      %1219 = vmatpush1.msra.mxu0 0.0
      %1220 = vmatprep.subr.mxu0 0.0
      %1221 = vmatpush1.msra.mxu0 0.0
      %1222 = vmatprep.subr.mxu0 0.0
      %1223 = vmatpush1.msra.mxu0 0.0
      %1224 = vmatprep.subr.mxu0 0.0
      %1225 = vmatpush1.msra.mxu0 0.0
      %1226 = vmatprep.mubr.f32.mxu0 0.0
      %1227 = vmatmul.mubr.f32.gmra.mrb[0].mxu0 %v1083
      %v1228 = vpop.f32.mrb[0].mxu0
      %v1229 = vadd.f32 %v1055, %v1228
      %v1230 = vpop.f32.mrb[0].mxu0
      %1231 = vdwg.mxu0
      %v1232 = vmax.f32 %v1158, 0.0
      %v1233 = vmax.f32 %v1160, 0.0
      %v1234 = vmax.f32 %v1229, 0.0
      %1236 = vrot.lane.b32.xlu0 %v1232, 126
      %v1237 = vpop.permute.xlu0 %1236
      %1239 = vrot.lane.b32.xlu0 %v1232, 124
      %v1240 = vpop.permute.xlu0 %1239
      %1242 = vrot.lane.b32.xlu0 %v1232, 122
      %v1243 = vpop.permute.xlu0 %1242
      %1245 = vrot.lane.b32.xlu0 %v1232, 120
      %v1246 = vpop.permute.xlu0 %1245
      %1248 = vrot.lane.b32.xlu0 %v1232, 118
      %v1249 = vpop.permute.xlu0 %1248
      %1251 = vrot.lane.b32.xlu0 %v1232, 116
      %v1252 = vpop.permute.xlu0 %1251
      %1255 = vrot.lane.b32.xlu0 %v1232, 114
      %v1256 = vpop.permute.xlu0 %1255
      %1257 = vrot.lane.b32.xlu0 %v1233, 114
      %v1258 = vpop.permute.xlu0 %1257
      %vm1259 = vcmask 932864
      %v1260 = vsel %vm1259, %v1256, %v1258
      %1262 = vrot.lane.b32.xlu0 %v1233, 112
      %v1263 = vpop.permute.xlu0 %1262
      %1265 = vrot.lane.b32.xlu0 %v1233, 110
      %v1266 = vpop.permute.xlu0 %1265
      %1268 = vrot.lane.b32.xlu0 %v1233, 108
      %v1269 = vpop.permute.xlu0 %1268
      %1271 = vrot.lane.b32.xlu0 %v1233, 106
      %v1272 = vpop.permute.xlu0 %1271
      %1274 = vrot.lane.b32.xlu0 %v1233, 104
      %v1275 = vpop.permute.xlu0 %1274
      %1277 = vrot.lane.b32.xlu0 %v1233, 102
      %v1278 = vpop.permute.xlu0 %1277
      %1281 = vrot.lane.b32.xlu0 %v1233, 100
      %v1282 = vpop.permute.xlu0 %1281
      %1283 = vrot.lane.b32.xlu0 %v1234, 100
      %v1284 = vpop.permute.xlu0 %1283
      %vm1285 = vcmask 818176
      %v1286 = vsel %vm1285, %v1282, %v1284
      %1288 = vrot.lane.b32.xlu0 %v1234, 98
      %v1289 = vpop.permute.xlu0 %1288
      %v1291 = vsel %vm873, %v1232, %v1237
      %v1292 = vsel %vm972, %v1291, %v1240
      %vm1293 = vcmask 392192
      %v1294 = vsel %vm1293, %v1292, %v1243
      %vm1295 = vcmask 523264
      %v1296 = vsel %vm1295, %v1294, %v1246
      %vm1297 = vcmask 654336
      %v1298 = vsel %vm1297, %v1296, %v1249
      %vm1299 = vcmask 785408
      %v1300 = vsel %vm1299, %v1298, %v1252
      %vm1301 = vcmask 916480
      %v1302 = vsel %vm1301, %v1300, %v1260
      %v1303 = vsel %vm873, %v1263, %v1266
      %v1304 = vsel %vm972, %v1303, %v1269
      %v1305 = vsel %vm1293, %v1304, %v1272
      %v1306 = vsel %vm1295, %v1305, %v1275
      %v1307 = vsel %vm1297, %v1306, %v1278
      %v1308 = vsel %vm1299, %v1307, %v1286
      %v1309 = vsel %vm1301, %v1308, %v1289
      %v1312 = vcombine.low %v1302, %v1309
      %1314 = vst [vmem:[%s298] sm:$0xff] %v1312
      %p1315 = scmp.lt.s32.totalorder %s18, 1
      %s1316 = scalar_select %p1315, %s18, 1
      %s1317 = smul.addr %s1316, 2
      %s1318 = smul.addr %s1317, 4
      %s1319 = scalar_lea.vmem %s7, %s1318
      // Predicated region
      $region49: #{decode_block_forward.1} parent=47 // pred_check
        %p1320 = pneg %p193
      $region50: #{decode_block_forward.1} parent=47 // pred_check_branch
        %1322 = sbr.rel (%p1320) target = $region52
      $region51: #{decode_block_forward.1} parent=47 // pred_region
        _
      $region52: #{decode_block_forward.1} parent=47 // pred_fallthru
        _
    $region48: #{decode_block_forward.1} parent=5 // pred_fallthru
      _
    %p1323 = scmp.le.s32.totalorder 2, %s13
    // Predicated region
    $region53: #{decode_block_forward.1} parent=5 // pred_check
      %p1324 = pneg %p1323
    $region54: #{decode_block_forward.1} parent=5 // pred_check_branch
      %1326 = sbr.rel (%p1324) target = $region56
    $region55: #{decode_block_forward.1} parent=5 // pred_region
      %s1327 = ssub.s32 %s13, 2
      // Predicated region
      $region57: #{decode_block_forward.1} parent=55 // pred_check
        %p1328 = pneg %p199
      $region58: #{decode_block_forward.1} parent=55 // pred_check_branch
        %1330 = sbr.rel (%p1328) target = $region60
      $region59: #{decode_block_forward.1} parent=55 // pred_region
        %p1331 = scmp.lt.s32.totalorder %s19, 1
        %s1332 = scalar_select %p1331, %s19, 1
        %s1333 = smul.addr %s1332, 2
        %s1334 = smul.addr %s1333, 4
        %s1335 = scalar_lea.vmem %s7, %s1334
      $region60: #{decode_block_forward.1} parent=55 // pred_fallthru
        _
    $region56: #{decode_block_forward.1} parent=5 // pred_fallthru
      _
  $region6: #{decode_block_forward.1} parent=0 // loop_footer
    %s17 = sadd.s32 1, %s13
  $region7: #{decode_block_forward.1} parent=0 // loop_footer_branch
    %12 = sbr.rel target = $region3
  $region8: #{decode_block_forward.1} parent=0 // loop_exit
    _

</llo_original>
